<compile_context>
chip_gen: v7x
topology: tpu7x:2x2x1
jax: 0.10.0
libtpu: 0.0.40
codegen_flags: <defaults>
</compile_context>

<pallas_src>
import jax
import jax.numpy as jnp
from jax.experimental import pallas as pl
from jax.experimental.pallas import tpu as pltpu


def _se_gate_mul_kernel(x_se_ref, w_ref, b_ref, x_ref, o_ref):
    # x_se_ref: (1, C_in)      squeeze-excite vector (row)
    # w_ref   : (tn, C_in)     1x1 conv weight tile
    # b_ref   : (tn, 1)        conv bias tile (column)
    # x_ref   : (tn, HW)       main activation tile (NCHW-contiguous)
    # o_ref   : (tn, HW)       output tile
    #
    # Gate on VPU (elementwise mul) + XLU (lane reduce): no MXU on the path.
    gate = jnp.sum(w_ref[...] * x_se_ref[...], axis=1, keepdims=True) + b_ref[...]
    gate = jax.nn.sigmoid(gate)                            # EUP (exp + recip)
    o_ref[...] = (x_ref[...] * gate).astype(o_ref.dtype)   # lane-broadcast gate


def _lane_pad(n):
    return ((n + 127) // 128) * 128


def _pick_tile(c_out, hw, c_in, vmem_budget_bytes=12 * 1024 * 1024):
    """Largest tile of C_out that (a) divides C_out, (b) is a sublane multiple
    of 8, (c) prefers an even grid >= 2 (megacore split + DMA overlap) and
    (d) keeps the double-buffered VMEM footprint under a conservative budget
    (binding case: v7x, 64 MiB physical / 32 MiB default scoped VMEM)."""

    def fits(tn):
        per_step = tn * (2 * _lane_pad(hw) + _lane_pad(c_in) + 128) * 4
        return 2 * per_step <= vmem_budget_bytes  # x2 for double buffering

    candidates = [t for t in range(8, c_out + 1, 8) if c_out % t == 0]
    candidates.sort(reverse=True)

    # Pass 1: even grid (>= 2).  Pass 2: any grid >= 2.  Largest tn wins.
    for want_even in (True, False):
        for tn in candidates:
            grid = c_out // tn
            if grid < 2:
                continue
            if want_even and grid % 2 != 0:
                continue
            if fits(tn):
                return tn
    # Pass 3: any divisor that is a multiple of 8 and fits (including grid=1).
    for tn in candidates:
        if fits(tn):
            return tn
    # Last resort: full-array block (always legal w.r.t. the (8,128) rule).
    return c_out


def conv1x1_sigmoid_mul(x454, x451, weight, bias):
    """Exact semantics of the PyTorch module M.forward.

    x454  : (N, C_in, 1, 1)   float32
    x451  : (N, C_out, H, W)  float32
    weight: (C_out, C_in, 1, 1)
    bias  : (C_out,)
    returns (N, C_out, H, W) float32
    """
    N, C_in, _, _ = x454.shape
    N2, C_out, H, W = x451.shape
    assert N == 1 and N2 == 1, "kernel specialized for batch 1 (as in the module)"

    hw = H * W
    # All of these reshapes are contiguous views -> no HBM transpose traffic.
    x_se = x454.reshape(1, C_in)                       # (1, C_in) row
    w = weight.reshape(C_out, C_in)                    # (C_out, C_in)
    b = bias.reshape(C_out, 1)                         # (C_out, 1)
    x_main = x451.reshape(C_out, hw)                   # (C_out, HW)

    tn = _pick_tile(C_out, hw, C_in)                   # 672 -> grid=2 here
    grid_n = pl.cdiv(C_out, tn)

    cost = pl.CostEstimate(
        flops=2 * C_out * C_in + C_out * hw,
        transcendentals=C_out,
        bytes_accessed=(2 * C_out * hw + C_out * C_in + C_out + C_in) * 4,
    )

    out = pl.pallas_call(
        _se_gate_mul_kernel,
        out_shape=jax.ShapeDtypeStruct((C_out, hw), x451.dtype),
        grid=(grid_n,),
        in_specs=[
            pl.BlockSpec((1, C_in), lambda i: (0, 0)),
            pl.BlockSpec((tn, C_in), lambda i: (i, 0)),
            pl.BlockSpec((tn, 1), lambda i: (i, 0)),
            pl.BlockSpec((tn, hw), lambda i: (i, 0)),
        ],
        out_specs=pl.BlockSpec((tn, hw), lambda i: (i, 0)),
        compiler_params=pltpu.CompilerParams(
            dimension_semantics=(pltpu.PARALLEL,)),
        cost_estimate=cost,
    )(x_se, w, b, x_main)

    # Contiguous reshape back to NCHW (free).
    return out.reshape(1, C_out, H, W)


if __name__ == "__main__":
    key = jax.random.PRNGKey(0)
    k1, k2, k3, k4 = jax.random.split(key, 4)

    C_in, C_out, H, W = 56, 1344, 14, 14

    # deterministic synthetic parameters (shapes from Conv2d(56, 1344, 1))
    weight = jax.random.normal(k1, (C_out, C_in, 1, 1), jnp.float32) * 0.05
    bias = jax.random.normal(k2, (C_out,), jnp.float32) * 0.05

    # deterministic inputs matching the module's shapes
    x454 = jax.random.normal(k3, (1, C_in, 1, 1), jnp.float32)
    x451 = jax.random.normal(k4, (1, C_out, H, W), jnp.float32)

    out = conv1x1_sigmoid_mul(x454, x451, weight, bias)
    out = jax.block_until_ready(out)

    # reference check in plain JAX
    gate_ref = jax.nn.sigmoid(
        jnp.einsum("oi,i->o", weight.reshape(C_out, C_in), x454.reshape(C_in)) + bias
    ).reshape(1, C_out, 1, 1)
    ref = gate_ref * x451
    assert out.shape == (1, C_out, H, W)
    assert jnp.allclose(out, ref, atol=1e-5, rtol=1e-5)

    print("KERNEL_OK")
</pallas_src>

<mosaic_0001>
module attributes {stable_mosaic.version = 11 : i64} {
  func.func @_se_gate_mul_kernel(%arg0: i32, %arg1: memref<1x56xf32, #tpu.memory_space<vmem>>, %arg2: memref<672x56xf32, #tpu.memory_space<vmem>>, %arg3: memref<672x1xf32, #tpu.memory_space<vmem>>, %arg4: memref<672x196xf32, #tpu.memory_space<vmem>>, %arg5: memref<672x196xf32, #tpu.memory_space<vmem>>) attributes {dimension_semantics = [#tpu.dimension_semantics<parallel>], iteration_bounds = array<i64: 2>, scalar_prefetch = 0 : i64, scratch_operands = 0 : i64, tpu.core_type = #tpu.core_type<tc>, window_params = [{pipeline_mode = #tpu.pipeline_mode<synchronous>, transform_indices = @transform_0, window_bounds = array<i64: 1, 56>}, {transform_indices = @transform_1, window_bounds = array<i64: 672, 56>}, {transform_indices = @transform_2, window_bounds = array<i64: 672, 1>}, {transform_indices = @transform_3, window_bounds = array<i64: 672, 196>}, {transform_indices = @transform_4, window_bounds = array<i64: 672, 196>}]} {
    %c0 = arith.constant 0 : index
    %c0_0 = arith.constant 0 : index
    %0 = vector.load %arg2[%c0, %c0_0] : memref<672x56xf32, #tpu.memory_space<vmem>>, vector<672x56xf32>
    %c0_1 = arith.constant 0 : index
    %c0_2 = arith.constant 0 : index
    %1 = vector.load %arg1[%c0_1, %c0_2] : memref<1x56xf32, #tpu.memory_space<vmem>>, vector<1x56xf32>
    %2 = vector.broadcast %1 : vector<1x56xf32> to vector<672x56xf32>
    %3 = arith.mulf %0, %2 : vector<672x56xf32>
    %cst = arith.constant dense<0.000000e+00> : vector<672xf32>
    %4 = vector.multi_reduction <add>, %3, %cst [1] : vector<672x56xf32> to vector<672xf32>
    %5 = vector.shape_cast %4 : vector<672xf32> to vector<672x1xf32>
    %c0_3 = arith.constant 0 : index
    %c0_4 = arith.constant 0 : index
    %6 = vector.load %arg3[%c0_3, %c0_4] : memref<672x1xf32, #tpu.memory_space<vmem>>, vector<672x1xf32>
    %7 = arith.addf %5, %6 : vector<672x1xf32>
    %8 = arith.negf %7 : vector<672x1xf32>
    %9 = math.exp %8 : vector<672x1xf32>
    %cst_5 = arith.constant 1.000000e+00 : f32
    %10 = vector.broadcast %cst_5 : f32 to vector<672x1xf32>
    %11 = arith.addf %10, %9 : vector<672x1xf32>
    %12 = arith.divf %10, %11 : vector<672x1xf32>
    %c0_6 = arith.constant 0 : index
    %c0_7 = arith.constant 0 : index
    %13 = vector.load %arg4[%c0_6, %c0_7] : memref<672x196xf32, #tpu.memory_space<vmem>>, vector<672x196xf32>
    %14 = vector.broadcast %12 : vector<672x1xf32> to vector<672x196xf32>
    %15 = arith.mulf %13, %14 : vector<672x196xf32>
    %c0_8 = arith.constant 0 : index
    %c0_9 = arith.constant 0 : index
    %16 = vector.load %arg5[%c0_8, %c0_9] : memref<672x196xf32, #tpu.memory_space<vmem>>, vector<672x196xf32>
    tpu.vector_store %arg5[%c0_8, %c0_9], %15 {strides = array<i32>} : memref<672x196xf32, #tpu.memory_space<vmem>>, vector<672x196xf32>,
    return
  }
  func.func @transform_0(%arg0: i32) -> (i32, i32) {
    %c0_i32 = arith.constant 0 : i32
    %c0_i32_0 = arith.constant 0 : i32
    %c0_i32_1 = arith.constant 0 : i32
    return %c0_i32, %c0_i32_0 : i32, i32
  }
  func.func @transform_1(%arg0: i32) -> (i32, i32) {
    %c0_i32 = arith.constant 0 : i32
    %c0_i32_0 = arith.constant 0 : i32
    return %arg0, %c0_i32 : i32, i32
  }
  func.func @transform_2(%arg0: i32) -> (i32, i32) {
    %c0_i32 = arith.constant 0 : i32
    %c0_i32_0 = arith.constant 0 : i32
    return %arg0, %c0_i32 : i32, i32
  }
  func.func @transform_3(%arg0: i32) -> (i32, i32) {
    %c0_i32 = arith.constant 0 : i32
    %c0_i32_0 = arith.constant 0 : i32
    return %arg0, %c0_i32 : i32, i32
  }
  func.func @transform_4(%arg0: i32) -> (i32, i32) {
    %c0_i32 = arith.constant 0 : i32
    %c0_i32_0 = arith.constant 0 : i32
    return %arg0, %c0_i32 : i32, i32
  }
}

</mosaic_0001>

<llo_original>
// kernel: tpu_custom_call.1
$region0: #{tpu_custom_call.1}
  #allocation0 [shape = 'u32[]', space=smem, size = 0x4, offset = 0x4, fixed_abs, tag = 'smem constant byte address 0x4 - core index']
  #allocation1 [shape = 'u32[144,128]{1,0:T(1,128)}', space=vmem, size = 0x12000, scoped, tag = 'internal scratch']
  %s0 = inlined_call_operand.vmem [shape: f32[1,56], index: 0, kind: input, shape index: {}]
  %s1 = inlined_call_operand.vmem [shape: f32[1344,56], index: 1, kind: input, shape index: {}]
  %s2 = inlined_call_operand.vmem [shape: f32[1344,1], index: 2, kind: input, shape index: {}]
  %s3 = inlined_call_operand.vmem [shape: f32[1344,196], index: 3, kind: input, shape index: {}]
  %s4 = inlined_call_operand.vmem [shape: f32[1344,196], index: 4, kind: output, shape index: {}]
  %s5 = sld [smem:[#allocation0]]
  $region49: #{tpu_custom_call.1} parent=0
    _
  %s7 = ssub.s32 1, %s5
  %s8 = scalar_select 0, %s7, %s5
  loop: start=0, step=1, limit=4
  $region2: #{tpu_custom_call.1} parent=0 // loop_pre_header
    _
  $region3: #{tpu_custom_call.1} parent=0 // loop_header
    %s10 = sphi 0, %s14
    %p11 = scmp.ge.s32.totalorder %s10, 4
    %s18 = sphi 0, %s18
    %s20 = sphi 0, %s18
    %s21 = sphi 0, %s20
    %s35 = sphi 0, %s21
    %s41 = sphi 0, %s43
    %s44 = sphi 0, %s41
    %s45 = sphi 0, %s44
    %s61 = sphi 0, %s45
    %s67 = sphi 0, %s69
    %s70 = sphi 0, %s67
    %s71 = sphi 0, %s70
    %s87 = sphi 0, %s71
    %s93 = sphi 0, %s95
    %s96 = sphi 0, %s93
    %s97 = sphi 0, %s96
    %s113 = sphi 0, %s97
    %s119 = sphi 0, %s121
    %s122 = sphi 0, %s119
    %s123 = sphi 0, %s122
    %s139 = sphi 0, %s123
  $region4: #{tpu_custom_call.1} parent=0 // loop_header_branch
    %13 = sbr.rel (%p11) target = $region8
  $region5: #{tpu_custom_call.1} parent=0 // loop_body
    %s15 = ssub.s32 %s10, 1
    %s16 = ssub.s32 %s10, 2
    %s17 = sadd.s32 %s10, 1
    %s19 = sadd.s32 %s18, 1
    %p22 = scmp.eq.s32.totalorder %s10, 1
    %p23 = scmp.ne.s32.totalorder %s18, %s20
    %p24 = scmp.eq.s32.totalorder %s10, 0
    %p25 = por %p23, %p24
    %p26 = scmp.ne.s32.totalorder %s18, %s20
    %p27 = scmp.eq.s32.totalorder %s15, 1
    %p28 = por %p26, %p27
    %p29 = scmp.ne.s32.totalorder %s20, %s21
    %p30 = scmp.eq.s32.totalorder %s15, 0
    %p31 = por %p29, %p30
    %p32 = scmp.ne.s32.totalorder %s20, %s21
    %p33 = scmp.eq.s32.totalorder %s16, 1
    %p34 = por %p32, %p33
    %p36 = scmp.ne.s32.totalorder %s21, %s35
    %p37 = scmp.eq.s32.totalorder %s16, 0
    %p38 = por %p36, %p37
    %s39 = ssub.s32 %s10, %s17
    %p40 = scmp.eq.s32.totalorder %s39, 0
    %s42 = sadd.s32 %s41, 1
    %s43 = scalar_select %p40, %s41, %s42
    %p46 = pneg %p40
    %p47 = scmp.eq.s32.totalorder %s10, 1
    %p48 = por %p46, %p47
    %p49 = scmp.ne.s32.totalorder %s41, %s44
    %p50 = scmp.eq.s32.totalorder %s10, 0
    %p51 = por %p49, %p50
    %p52 = scmp.ne.s32.totalorder %s41, %s44
    %p53 = scmp.eq.s32.totalorder %s15, 1
    %p54 = por %p52, %p53
    %p55 = scmp.ne.s32.totalorder %s44, %s45
    %p56 = scmp.eq.s32.totalorder %s15, 0
    %p57 = por %p55, %p56
    %p58 = scmp.ne.s32.totalorder %s44, %s45
    %p59 = scmp.eq.s32.totalorder %s16, 1
    %p60 = por %p58, %p59
    %p62 = scmp.ne.s32.totalorder %s45, %s61
    %p63 = scmp.eq.s32.totalorder %s16, 0
    %p64 = por %p62, %p63
    %s65 = ssub.s32 %s10, %s17
    %p66 = scmp.eq.s32.totalorder %s65, 0
    %s68 = sadd.s32 %s67, 1
    %s69 = scalar_select %p66, %s67, %s68
    %p72 = pneg %p66
    %p73 = scmp.eq.s32.totalorder %s10, 1
    %p74 = por %p72, %p73
    %p75 = scmp.ne.s32.totalorder %s67, %s70
    %p76 = scmp.eq.s32.totalorder %s10, 0
    %p77 = por %p75, %p76
    %p78 = scmp.ne.s32.totalorder %s67, %s70
    %p79 = scmp.eq.s32.totalorder %s15, 1
    %p80 = por %p78, %p79
    %p81 = scmp.ne.s32.totalorder %s70, %s71
    %p82 = scmp.eq.s32.totalorder %s15, 0
    %p83 = por %p81, %p82
    %p84 = scmp.ne.s32.totalorder %s70, %s71
    %p85 = scmp.eq.s32.totalorder %s16, 1
    %p86 = por %p84, %p85
    %p88 = scmp.ne.s32.totalorder %s71, %s87
    %p89 = scmp.eq.s32.totalorder %s16, 0
    %p90 = por %p88, %p89
    %s91 = ssub.s32 %s10, %s17
    %p92 = scmp.eq.s32.totalorder %s91, 0
    %s94 = sadd.s32 %s93, 1
    %s95 = scalar_select %p92, %s93, %s94
    %p98 = pneg %p92
    %p99 = scmp.eq.s32.totalorder %s10, 1
    %p100 = por %p98, %p99
    %p101 = scmp.ne.s32.totalorder %s93, %s96
    %p102 = scmp.eq.s32.totalorder %s10, 0
    %p103 = por %p101, %p102
    %p104 = scmp.ne.s32.totalorder %s93, %s96
    %p105 = scmp.eq.s32.totalorder %s15, 1
    %p106 = por %p104, %p105
    %p107 = scmp.ne.s32.totalorder %s96, %s97
    %p108 = scmp.eq.s32.totalorder %s15, 0
    %p109 = por %p107, %p108
    %p110 = scmp.ne.s32.totalorder %s96, %s97
    %p111 = scmp.eq.s32.totalorder %s16, 1
    %p112 = por %p110, %p111
    %p114 = scmp.ne.s32.totalorder %s97, %s113
    %p115 = scmp.eq.s32.totalorder %s16, 0
    %p116 = por %p114, %p115
    %s117 = ssub.s32 %s10, %s17
    %p118 = scmp.eq.s32.totalorder %s117, 0
    %s120 = sadd.s32 %s119, 1
    %s121 = scalar_select %p118, %s119, %s120
    %p124 = pneg %p118
    %p125 = scmp.eq.s32.totalorder %s10, 1
    %p126 = por %p124, %p125
    %p127 = scmp.ne.s32.totalorder %s119, %s122
    %p128 = scmp.eq.s32.totalorder %s10, 0
    %p129 = por %p127, %p128
    %p130 = scmp.ne.s32.totalorder %s119, %s122
    %p131 = scmp.eq.s32.totalorder %s15, 1
    %p132 = por %p130, %p131
    %p133 = scmp.ne.s32.totalorder %s122, %s123
    %p134 = scmp.eq.s32.totalorder %s15, 0
    %p135 = por %p133, %p134
    %p136 = scmp.ne.s32.totalorder %s122, %s123
    %p137 = scmp.eq.s32.totalorder %s16, 1
    %p138 = por %p136, %p137
    %p140 = scmp.ne.s32.totalorder %s123, %s139
    %p141 = scmp.eq.s32.totalorder %s16, 0
    %p142 = por %p140, %p141
    %p143 = scmp.le.s32.totalorder 1, %s10
    %p144 = scmp.lt.s32.totalorder %s10, 3
    %p145 = pnand %p143, %p144
    %p146 = pneg %p145
    // Predicated region
    $region9: #{tpu_custom_call.1} parent=5 // pred_check
      _
    $region10: #{tpu_custom_call.1} parent=5 // pred_check_branch
      %148 = sbr.rel (%p145) target = $region12
    $region11: #{tpu_custom_call.1} parent=5 // pred_region
      %s149 = ssub.s32 %s10, 1
      // Predicated region
      $region13: #{tpu_custom_call.1} parent=11 // pred_check
        %p150 = pneg %p31
      $region14: #{tpu_custom_call.1} parent=11 // pred_check_branch
        %152 = sbr.rel (%p150) target = $region16
      $region15: #{tpu_custom_call.1} parent=11 // pred_region
        _
      $region16: #{tpu_custom_call.1} parent=11 // pred_fallthru
        _
    $region12: #{tpu_custom_call.1} parent=5 // pred_fallthru
      _
    %p153 = scmp.lt.s32.totalorder %s10, 2
    // Predicated region
    $region17: #{tpu_custom_call.1} parent=5 // pred_check
      %p154 = pneg %p153
    $region18: #{tpu_custom_call.1} parent=5 // pred_check_branch
      %156 = sbr.rel (%p154) target = $region20
    $region19: #{tpu_custom_call.1} parent=5 // pred_region
      // Predicated region
      $region21: #{tpu_custom_call.1} parent=19 // pred_check
        %p157 = pneg %p51
      $region22: #{tpu_custom_call.1} parent=19 // pred_check_branch
        %159 = sbr.rel (%p157) target = $region24
      $region23: #{tpu_custom_call.1} parent=19 // pred_region
        %s160 = smul.u32 84, %s10
        %p161 = scmp.lt.s32.totalorder %s160, 167
        %s162 = scalar_select %p161, %s160, 167
        %s163 = smul.addr %s162, 8
        %s164 = scalar_lea.vmem %s1, %s163
        %s165 = smul.u32 84, %s10
      $region24: #{tpu_custom_call.1} parent=19 // pred_fallthru
        _
      // Predicated region
      $region25: #{tpu_custom_call.1} parent=19 // pred_check
        %p166 = pneg %p77
      $region26: #{tpu_custom_call.1} parent=19 // pred_check_branch
        %168 = sbr.rel (%p166) target = $region28
      $region27: #{tpu_custom_call.1} parent=19 // pred_region
        %s169 = smul.u32 84, %s10
        %p170 = scmp.lt.s32.totalorder %s169, 167
        %s171 = scalar_select %p170, %s169, 167
        %s172 = smul.addr %s171, 8
        %s173 = scalar_lea.vmem %s2, %s172
        %s174 = smul.u32 84, %s10
      $region28: #{tpu_custom_call.1} parent=19 // pred_fallthru
        _
      // Predicated region
      $region29: #{tpu_custom_call.1} parent=19 // pred_check
        %p175 = pneg %p103
      $region30: #{tpu_custom_call.1} parent=19 // pred_check_branch
        %177 = sbr.rel (%p175) target = $region32
      $region31: #{tpu_custom_call.1} parent=19 // pred_region
        %s178 = smul.u32 84, %s10
        %p179 = scmp.lt.s32.totalorder %s178, 167
        %s180 = scalar_select %p179, %s178, 167
        %s181 = smul.addr %s180, 2
        %s182 = smul.addr %s181, 8
        %s183 = scalar_lea.vmem %s3, %s182
        %s184 = smul.u32 84, %s10
      $region32: #{tpu_custom_call.1} parent=19 // pred_fallthru
        _
    $region20: #{tpu_custom_call.1} parent=5 // pred_fallthru
      _
    %p185 = scmp.le.s32.totalorder 1, %s10
    %p186 = scmp.lt.s32.totalorder %s10, 3
    %p187 = pnand %p185, %p186
    %p188 = pneg %p187
    // Predicated region
    $region33: #{tpu_custom_call.1} parent=5 // pred_check
      _
    $region34: #{tpu_custom_call.1} parent=5 // pred_check_branch
      %190 = sbr.rel (%p187) target = $region36
    $region35: #{tpu_custom_call.1} parent=5 // pred_region
      %s191 = ssub.s32 %s10, 1
      %p192 = pneg %p31
      %p193 = pneg %p28
      %s194 = smul.u32 84, %s15
      %p195 = scmp.lt.s32.totalorder %s194, 167
      %s196 = scalar_select %p195, %s194, 167
      %s197 = smul.addr %s196, 8
      %s198 = scalar_lea.vmem %s1, %s197
      %p199 = pneg %p57
      %p200 = pneg %p54
      %s201 = smul.u32 84, %s15
      %p202 = scmp.lt.s32.totalorder %s201, 167
      %s203 = scalar_select %p202, %s201, 167
      %s204 = smul.addr %s203, 8
      %s205 = scalar_lea.vmem %s2, %s204
      %p206 = pneg %p83
      %p207 = pneg %p80
      %s208 = smul.u32 84, %s15
      %p209 = scmp.lt.s32.totalorder %s208, 167
      %s210 = scalar_select %p209, %s208, 167
      %s211 = smul.addr %s210, 2
      %s212 = smul.addr %s211, 8
      %s213 = scalar_lea.vmem %s3, %s212
      %p214 = pneg %p109
      %p215 = pneg %p106
      %p216 = pneg %p135
      %p217 = pneg %p132
      %s218 = smul.u32 84, %s15
      %p219 = scmp.lt.s32.totalorder %s218, 167
      %s220 = scalar_select %p219, %s218, 167
      %s221 = smul.addr %s220, 2
      %s222 = smul.addr %s221, 8
      %s223 = scalar_lea.vmem %s4, %s222
      %s224 = smul.u32 84, %s15
      %p225 = scmp.lt.s32.totalorder %s224, 167
      %s226 = scalar_select %p225, %s224, 167
      %s227 = smul.addr %s226, 8
      %s228 = scalar_lea.vmem %s1, %s227
      %s229 = smul.u32 84, %s15
      %s230 = smul.u32 84, %s15
      %p231 = scmp.lt.s32.totalorder %s230, 167
      %s232 = scalar_select %p231, %s230, 167
      %s233 = smul.addr %s232, 8
      %s234 = scalar_lea.vmem %s2, %s233
      %s235 = smul.u32 84, %s15
      %s236 = smul.u32 84, %s15
      %p237 = scmp.lt.s32.totalorder %s236, 167
      %s238 = scalar_select %p237, %s236, 167
      %s239 = smul.addr %s238, 2
      %s240 = smul.addr %s239, 8
      %s241 = scalar_lea.vmem %s3, %s240
      %s242 = smul.u32 84, %s15
      %s243 = smul.u32 84, %s15
      %p244 = scmp.lt.s32.totalorder %s243, 167
      %s245 = scalar_select %p244, %s243, 167
      %s246 = smul.addr %s245, 2
      %s247 = smul.addr %s246, 8
      %s248 = scalar_lea.vmem %s4, %s247
      %s249 = smul.u32 84, %s15
      %v250 = vld [vmem:[%s228] sm:$0xff]
      %v251 = vld [vmem:[%s228 + $0x8] sm:$0xff]
      %v252 = vld [vmem:[%s228 + $0x10] sm:$0xff]
      %v253 = vld [vmem:[%s228 + $0x18] sm:$0xff]
      %v254 = vld [vmem:[%s228 + $0x20] sm:$0xff]
      %v255 = vld [vmem:[%s228 + $0x28] sm:$0xff]
      %v256 = vld [vmem:[%s228 + $0x30] sm:$0xff]
      %v257 = vld [vmem:[%s228 + $0x38] sm:$0xff]
      %v258 = vld [vmem:[%s228 + $0x40] sm:$0xff]
      %v259 = vld [vmem:[%s228 + $0x48] sm:$0xff]
      %v260 = vld [vmem:[%s228 + $0x50] sm:$0xff]
      %v261 = vld [vmem:[%s228 + $0x58] sm:$0xff]
      %v262 = vld [vmem:[%s228 + $0x60] sm:$0xff]
      %v263 = vld [vmem:[%s228 + $0x68] sm:$0xff]
      %v264 = vld [vmem:[%s228 + $0x70] sm:$0xff]
      %v265 = vld [vmem:[%s228 + $0x78] sm:$0xff]
      %v266 = vld [vmem:[%s228 + $0x80] sm:$0xff]
      %v267 = vld [vmem:[%s228 + $0x88] sm:$0xff]
      %v268 = vld [vmem:[%s228 + $0x90] sm:$0xff]
      %v269 = vld [vmem:[%s228 + $0x98] sm:$0xff]
      %v270 = vld [vmem:[%s228 + $0xa0] sm:$0xff]
      %v271 = vld [vmem:[%s228 + $0xa8] sm:$0xff]
      %v272 = vld [vmem:[%s228 + $0xb0] sm:$0xff]
      %v273 = vld [vmem:[%s228 + $0xb8] sm:$0xff]
      %v274 = vld [vmem:[%s228 + $0xc0] sm:$0xff]
      %v275 = vld [vmem:[%s228 + $0xc8] sm:$0xff]
      %v276 = vld [vmem:[%s228 + $0xd0] sm:$0xff]
      %v277 = vld [vmem:[%s228 + $0xd8] sm:$0xff]
      %v278 = vld [vmem:[%s228 + $0xe0] sm:$0xff]
      %v279 = vld [vmem:[%s228 + $0xe8] sm:$0xff]
      %v280 = vld [vmem:[%s228 + $0xf0] sm:$0xff]
      %v281 = vld [vmem:[%s228 + $0xf8] sm:$0xff]
      %v282 = vld [vmem:[%s228 + $0x100] sm:$0xff]
      %v283 = vld [vmem:[%s228 + $0x108] sm:$0xff]
      %v284 = vld [vmem:[%s228 + $0x110] sm:$0xff]
      %v285 = vld [vmem:[%s228 + $0x118] sm:$0xff]
      %v286 = vld [vmem:[%s228 + $0x120] sm:$0xff]
      %v287 = vld [vmem:[%s228 + $0x128] sm:$0xff]
      %v288 = vld [vmem:[%s228 + $0x130] sm:$0xff]
      %v289 = vld [vmem:[%s228 + $0x138] sm:$0xff]
      %v290 = vld [vmem:[%s228 + $0x140] sm:$0xff]
      %v291 = vld [vmem:[%s228 + $0x148] sm:$0xff]
      %v292 = vld [vmem:[%s228 + $0x150] sm:$0xff]
      %v293 = vld [vmem:[%s228 + $0x158] sm:$0xff]
      %v294 = vld [vmem:[%s228 + $0x160] sm:$0xff]
      %v295 = vld [vmem:[%s228 + $0x168] sm:$0xff]
      %v296 = vld [vmem:[%s228 + $0x170] sm:$0xff]
      %v297 = vld [vmem:[%s228 + $0x178] sm:$0xff]
      %v298 = vld [vmem:[%s228 + $0x180] sm:$0xff]
      %v299 = vld [vmem:[%s228 + $0x188] sm:$0xff]
      %v300 = vld [vmem:[%s228 + $0x190] sm:$0xff]
      %v301 = vld [vmem:[%s228 + $0x198] sm:$0xff]
      %v302 = vld [vmem:[%s228 + $0x1a0] sm:$0xff]
      %v303 = vld [vmem:[%s228 + $0x1a8] sm:$0xff]
      %v304 = vld [vmem:[%s228 + $0x1b0] sm:$0xff]
      %v305 = vld [vmem:[%s228 + $0x1b8] sm:$0xff]
      %v306 = vld [vmem:[%s228 + $0x1c0] sm:$0xff]
      %v307 = vld [vmem:[%s228 + $0x1c8] sm:$0xff]
      %v308 = vld [vmem:[%s228 + $0x1d0] sm:$0xff]
      %v309 = vld [vmem:[%s228 + $0x1d8] sm:$0xff]
      %v310 = vld [vmem:[%s228 + $0x1e0] sm:$0xff]
      %v311 = vld [vmem:[%s228 + $0x1e8] sm:$0xff]
      %v312 = vld [vmem:[%s228 + $0x1f0] sm:$0xff]
      %v313 = vld [vmem:[%s228 + $0x1f8] sm:$0xff]
      %v314 = vld [vmem:[%s228 + $0x200] sm:$0xff]
      %v315 = vld [vmem:[%s228 + $0x208] sm:$0xff]
      %v316 = vld [vmem:[%s228 + $0x210] sm:$0xff]
      %v317 = vld [vmem:[%s228 + $0x218] sm:$0xff]
      %v318 = vld [vmem:[%s228 + $0x220] sm:$0xff]
      %v319 = vld [vmem:[%s228 + $0x228] sm:$0xff]
      %v320 = vld [vmem:[%s228 + $0x230] sm:$0xff]
      %v321 = vld [vmem:[%s228 + $0x238] sm:$0xff]
      %v322 = vld [vmem:[%s228 + $0x240] sm:$0xff]
      %v323 = vld [vmem:[%s228 + $0x248] sm:$0xff]
      %v324 = vld [vmem:[%s228 + $0x250] sm:$0xff]
      %v325 = vld [vmem:[%s228 + $0x258] sm:$0xff]
      %v326 = vld [vmem:[%s228 + $0x260] sm:$0xff]
      %v327 = vld [vmem:[%s228 + $0x268] sm:$0xff]
      %v328 = vld [vmem:[%s228 + $0x270] sm:$0xff]
      %v329 = vld [vmem:[%s228 + $0x278] sm:$0xff]
      %v330 = vld [vmem:[%s228 + $0x280] sm:$0xff]
      %v331 = vld [vmem:[%s228 + $0x288] sm:$0xff]
      %v332 = vld [vmem:[%s228 + $0x290] sm:$0xff]
      %v333 = vld [vmem:[%s228 + $0x298] sm:$0xff]
      %v334 = vld [vmem:[%s0] sm:$0x1]
      %v336 = vlaneseq
      %v337 = vshrl.u32 %v336, 7
      %v338 = vsub.s32 0, %v337
      %v339 = vrot.slane %v334, %v338
      %v341 = vmul.f32 %v250, %v339
      %v342 = vmul.f32 %v251, %v339
      %v343 = vmul.f32 %v252, %v339
      %v344 = vmul.f32 %v253, %v339
      %v345 = vmul.f32 %v254, %v339
      %v346 = vmul.f32 %v255, %v339
      %v347 = vmul.f32 %v256, %v339
      %v348 = vmul.f32 %v257, %v339
      %v349 = vmul.f32 %v258, %v339
      %v350 = vmul.f32 %v259, %v339
      %v351 = vmul.f32 %v260, %v339
      %v352 = vmul.f32 %v261, %v339
      %v353 = vmul.f32 %v262, %v339
      %v354 = vmul.f32 %v263, %v339
      %v355 = vmul.f32 %v264, %v339
      %v356 = vmul.f32 %v265, %v339
      %v357 = vmul.f32 %v266, %v339
      %v358 = vmul.f32 %v267, %v339
      %v359 = vmul.f32 %v268, %v339
      %v360 = vmul.f32 %v269, %v339
      %v361 = vmul.f32 %v270, %v339
      %v362 = vmul.f32 %v271, %v339
      %v363 = vmul.f32 %v272, %v339
      %v364 = vmul.f32 %v273, %v339
      %v365 = vmul.f32 %v274, %v339
      %v366 = vmul.f32 %v275, %v339
      %v367 = vmul.f32 %v276, %v339
      %v368 = vmul.f32 %v277, %v339
      %v369 = vmul.f32 %v278, %v339
      %v370 = vmul.f32 %v279, %v339
      %v371 = vmul.f32 %v280, %v339
      %v372 = vmul.f32 %v281, %v339
      %v373 = vmul.f32 %v282, %v339
      %v374 = vmul.f32 %v283, %v339
      %v375 = vmul.f32 %v284, %v339
      %v376 = vmul.f32 %v285, %v339
      %v377 = vmul.f32 %v286, %v339
      %v378 = vmul.f32 %v287, %v339
      %v379 = vmul.f32 %v288, %v339
      %v380 = vmul.f32 %v289, %v339
      %v381 = vmul.f32 %v290, %v339
      %v382 = vmul.f32 %v291, %v339
      %v383 = vmul.f32 %v292, %v339
      %v384 = vmul.f32 %v293, %v339
      %v385 = vmul.f32 %v294, %v339
      %v386 = vmul.f32 %v295, %v339
      %v387 = vmul.f32 %v296, %v339
      %v388 = vmul.f32 %v297, %v339
      %v389 = vmul.f32 %v298, %v339
      %v390 = vmul.f32 %v299, %v339
      %v391 = vmul.f32 %v300, %v339
      %v392 = vmul.f32 %v301, %v339
      %v393 = vmul.f32 %v302, %v339
      %v394 = vmul.f32 %v303, %v339
      %v395 = vmul.f32 %v304, %v339
      %v396 = vmul.f32 %v305, %v339
      %v397 = vmul.f32 %v306, %v339
      %v398 = vmul.f32 %v307, %v339
      %v399 = vmul.f32 %v308, %v339
      %v400 = vmul.f32 %v309, %v339
      %v401 = vmul.f32 %v310, %v339
      %v402 = vmul.f32 %v311, %v339
      %v403 = vmul.f32 %v312, %v339
      %v404 = vmul.f32 %v313, %v339
      %v405 = vmul.f32 %v314, %v339
      %v406 = vmul.f32 %v315, %v339
      %v407 = vmul.f32 %v316, %v339
      %v408 = vmul.f32 %v317, %v339
      %v409 = vmul.f32 %v318, %v339
      %v410 = vmul.f32 %v319, %v339
      %v411 = vmul.f32 %v320, %v339
      %v412 = vmul.f32 %v321, %v339
      %v413 = vmul.f32 %v322, %v339
      %v414 = vmul.f32 %v323, %v339
      %v415 = vmul.f32 %v324, %v339
      %v416 = vmul.f32 %v325, %v339
      %v417 = vmul.f32 %v326, %v339
      %v418 = vmul.f32 %v327, %v339
      %v419 = vmul.f32 %v328, %v339
      %v420 = vmul.f32 %v329, %v339
      %v421 = vmul.f32 %v330, %v339
      %v422 = vmul.f32 %v331, %v339
      %v423 = vmul.f32 %v332, %v339
      %v424 = vmul.f32 %v333, %v339
      %vm425 = vcmask 457728
      %v426 = vsel %vm425, %v341, 0.0
      %427 = vadd.xlane.f32.xlu0 %v426
      %v428 = vpop.xlane.xlu0 %427
      %v429 = vsel %vm425, %v342, 0.0
      %430 = vadd.xlane.f32.xlu0 %v429
      %v431 = vpop.xlane.xlu0 %430
      %v432 = vsel %vm425, %v343, 0.0
      %433 = vadd.xlane.f32.xlu0 %v432
      %v434 = vpop.xlane.xlu0 %433
      %v435 = vsel %vm425, %v344, 0.0
      %436 = vadd.xlane.f32.xlu0 %v435
      %v437 = vpop.xlane.xlu0 %436
      %v438 = vsel %vm425, %v345, 0.0
      %439 = vadd.xlane.f32.xlu0 %v438
      %v440 = vpop.xlane.xlu0 %439
      %v441 = vsel %vm425, %v346, 0.0
      %442 = vadd.xlane.f32.xlu0 %v441
      %v443 = vpop.xlane.xlu0 %442
      %v444 = vsel %vm425, %v347, 0.0
      %445 = vadd.xlane.f32.xlu0 %v444
      %v446 = vpop.xlane.xlu0 %445
      %v447 = vsel %vm425, %v348, 0.0
      %448 = vadd.xlane.f32.xlu0 %v447
      %v449 = vpop.xlane.xlu0 %448
      %v450 = vsel %vm425, %v349, 0.0
      %451 = vadd.xlane.f32.xlu0 %v450
      %v452 = vpop.xlane.xlu0 %451
      %v453 = vsel %vm425, %v350, 0.0
      %454 = vadd.xlane.f32.xlu0 %v453
      %v455 = vpop.xlane.xlu0 %454
      %v456 = vsel %vm425, %v351, 0.0
      %457 = vadd.xlane.f32.xlu0 %v456
      %v458 = vpop.xlane.xlu0 %457
      %v459 = vsel %vm425, %v352, 0.0
      %460 = vadd.xlane.f32.xlu0 %v459
      %v461 = vpop.xlane.xlu0 %460
      %v462 = vsel %vm425, %v353, 0.0
      %463 = vadd.xlane.f32.xlu0 %v462
      %v464 = vpop.xlane.xlu0 %463
      %v465 = vsel %vm425, %v354, 0.0
      %466 = vadd.xlane.f32.xlu0 %v465
      %v467 = vpop.xlane.xlu0 %466
      %v468 = vsel %vm425, %v355, 0.0
      %469 = vadd.xlane.f32.xlu0 %v468
      %v470 = vpop.xlane.xlu0 %469
      %v471 = vsel %vm425, %v356, 0.0
      %472 = vadd.xlane.f32.xlu0 %v471
      %v473 = vpop.xlane.xlu0 %472
      %v474 = vsel %vm425, %v357, 0.0
      %475 = vadd.xlane.f32.xlu0 %v474
      %v476 = vpop.xlane.xlu0 %475
      %v477 = vsel %vm425, %v358, 0.0
      %478 = vadd.xlane.f32.xlu0 %v477
      %v479 = vpop.xlane.xlu0 %478
      %v480 = vsel %vm425, %v359, 0.0
      %481 = vadd.xlane.f32.xlu0 %v480
      %v482 = vpop.xlane.xlu0 %481
      %v483 = vsel %vm425, %v360, 0.0
      %484 = vadd.xlane.f32.xlu0 %v483
      %v485 = vpop.xlane.xlu0 %484
      %v486 = vsel %vm425, %v361, 0.0
      %487 = vadd.xlane.f32.xlu0 %v486
      %v488 = vpop.xlane.xlu0 %487
      %v489 = vsel %vm425, %v362, 0.0
      %490 = vadd.xlane.f32.xlu0 %v489
      %v491 = vpop.xlane.xlu0 %490
      %v492 = vsel %vm425, %v363, 0.0
      %493 = vadd.xlane.f32.xlu0 %v492
      %v494 = vpop.xlane.xlu0 %493
      %v495 = vsel %vm425, %v364, 0.0
      %496 = vadd.xlane.f32.xlu0 %v495
      %v497 = vpop.xlane.xlu0 %496
      %v498 = vsel %vm425, %v365, 0.0
      %499 = vadd.xlane.f32.xlu0 %v498
      %v500 = vpop.xlane.xlu0 %499
      %v501 = vsel %vm425, %v366, 0.0
      %502 = vadd.xlane.f32.xlu0 %v501
      %v503 = vpop.xlane.xlu0 %502
      %v504 = vsel %vm425, %v367, 0.0
      %505 = vadd.xlane.f32.xlu0 %v504
      %v506 = vpop.xlane.xlu0 %505
      %v507 = vsel %vm425, %v368, 0.0
      %508 = vadd.xlane.f32.xlu0 %v507
      %v509 = vpop.xlane.xlu0 %508
      %v510 = vsel %vm425, %v369, 0.0
      %511 = vadd.xlane.f32.xlu0 %v510
      %v512 = vpop.xlane.xlu0 %511
      %v513 = vsel %vm425, %v370, 0.0
      %514 = vadd.xlane.f32.xlu0 %v513
      %v515 = vpop.xlane.xlu0 %514
      %v516 = vsel %vm425, %v371, 0.0
      %517 = vadd.xlane.f32.xlu0 %v516
      %v518 = vpop.xlane.xlu0 %517
      %v519 = vsel %vm425, %v372, 0.0
      %520 = vadd.xlane.f32.xlu0 %v519
      %v521 = vpop.xlane.xlu0 %520
      %v522 = vsel %vm425, %v373, 0.0
      %523 = vadd.xlane.f32.xlu0 %v522
      %v524 = vpop.xlane.xlu0 %523
      %v525 = vsel %vm425, %v374, 0.0
      %526 = vadd.xlane.f32.xlu0 %v525
      %v527 = vpop.xlane.xlu0 %526
      %v528 = vsel %vm425, %v375, 0.0
      %529 = vadd.xlane.f32.xlu0 %v528
      %v530 = vpop.xlane.xlu0 %529
      %v531 = vsel %vm425, %v376, 0.0
      %532 = vadd.xlane.f32.xlu0 %v531
      %v533 = vpop.xlane.xlu0 %532
      %v534 = vsel %vm425, %v377, 0.0
      %535 = vadd.xlane.f32.xlu0 %v534
      %v536 = vpop.xlane.xlu0 %535
      %v537 = vsel %vm425, %v378, 0.0
      %538 = vadd.xlane.f32.xlu0 %v537
      %v539 = vpop.xlane.xlu0 %538
      %v540 = vsel %vm425, %v379, 0.0
      %541 = vadd.xlane.f32.xlu0 %v540
      %v542 = vpop.xlane.xlu0 %541
      %v543 = vsel %vm425, %v380, 0.0
      %544 = vadd.xlane.f32.xlu0 %v543
      %v545 = vpop.xlane.xlu0 %544
      %v546 = vsel %vm425, %v381, 0.0
      %547 = vadd.xlane.f32.xlu0 %v546
      %v548 = vpop.xlane.xlu0 %547
      %v549 = vsel %vm425, %v382, 0.0
      %550 = vadd.xlane.f32.xlu0 %v549
      %v551 = vpop.xlane.xlu0 %550
      %v552 = vsel %vm425, %v383, 0.0
      %553 = vadd.xlane.f32.xlu0 %v552
      %v554 = vpop.xlane.xlu0 %553
      %v555 = vsel %vm425, %v384, 0.0
      %556 = vadd.xlane.f32.xlu0 %v555
      %v557 = vpop.xlane.xlu0 %556
      %v558 = vsel %vm425, %v385, 0.0
      %559 = vadd.xlane.f32.xlu0 %v558
      %v560 = vpop.xlane.xlu0 %559
      %v561 = vsel %vm425, %v386, 0.0
      %562 = vadd.xlane.f32.xlu0 %v561
      %v563 = vpop.xlane.xlu0 %562
      %v564 = vsel %vm425, %v387, 0.0
      %565 = vadd.xlane.f32.xlu0 %v564
      %v566 = vpop.xlane.xlu0 %565
      %v567 = vsel %vm425, %v388, 0.0
      %568 = vadd.xlane.f32.xlu0 %v567
      %v569 = vpop.xlane.xlu0 %568
      %v570 = vsel %vm425, %v389, 0.0
      %571 = vadd.xlane.f32.xlu0 %v570
      %v572 = vpop.xlane.xlu0 %571
      %v573 = vsel %vm425, %v390, 0.0
      %574 = vadd.xlane.f32.xlu0 %v573
      %v575 = vpop.xlane.xlu0 %574
      %v576 = vsel %vm425, %v391, 0.0
      %577 = vadd.xlane.f32.xlu0 %v576
      %v578 = vpop.xlane.xlu0 %577
      %v579 = vsel %vm425, %v392, 0.0
      %580 = vadd.xlane.f32.xlu0 %v579
      %v581 = vpop.xlane.xlu0 %580
      %v582 = vsel %vm425, %v393, 0.0
      %583 = vadd.xlane.f32.xlu0 %v582
      %v584 = vpop.xlane.xlu0 %583
      %v585 = vsel %vm425, %v394, 0.0
      %586 = vadd.xlane.f32.xlu0 %v585
      %v587 = vpop.xlane.xlu0 %586
      %v588 = vsel %vm425, %v395, 0.0
      %589 = vadd.xlane.f32.xlu0 %v588
      %v590 = vpop.xlane.xlu0 %589
      %v591 = vsel %vm425, %v396, 0.0
      %592 = vadd.xlane.f32.xlu0 %v591
      %v593 = vpop.xlane.xlu0 %592
      %v594 = vsel %vm425, %v397, 0.0
      %595 = vadd.xlane.f32.xlu0 %v594
      %v596 = vpop.xlane.xlu0 %595
      %v597 = vsel %vm425, %v398, 0.0
      %598 = vadd.xlane.f32.xlu0 %v597
      %v599 = vpop.xlane.xlu0 %598
      %v600 = vsel %vm425, %v399, 0.0
      %601 = vadd.xlane.f32.xlu0 %v600
      %v602 = vpop.xlane.xlu0 %601
      %v603 = vsel %vm425, %v400, 0.0
      %604 = vadd.xlane.f32.xlu0 %v603
      %v605 = vpop.xlane.xlu0 %604
      %v606 = vsel %vm425, %v401, 0.0
      %607 = vadd.xlane.f32.xlu0 %v606
      %v608 = vpop.xlane.xlu0 %607
      %v609 = vsel %vm425, %v402, 0.0
      %610 = vadd.xlane.f32.xlu0 %v609
      %v611 = vpop.xlane.xlu0 %610
      %v612 = vsel %vm425, %v403, 0.0
      %613 = vadd.xlane.f32.xlu0 %v612
      %v614 = vpop.xlane.xlu0 %613
      %v615 = vsel %vm425, %v404, 0.0
      %616 = vadd.xlane.f32.xlu0 %v615
      %v617 = vpop.xlane.xlu0 %616
      %v618 = vsel %vm425, %v405, 0.0
      %619 = vadd.xlane.f32.xlu0 %v618
      %v620 = vpop.xlane.xlu0 %619
      %v621 = vsel %vm425, %v406, 0.0
      %622 = vadd.xlane.f32.xlu0 %v621
      %v623 = vpop.xlane.xlu0 %622
      %v624 = vsel %vm425, %v407, 0.0
      %625 = vadd.xlane.f32.xlu0 %v624
      %v626 = vpop.xlane.xlu0 %625
      %v627 = vsel %vm425, %v408, 0.0
      %628 = vadd.xlane.f32.xlu0 %v627
      %v629 = vpop.xlane.xlu0 %628
      %v630 = vsel %vm425, %v409, 0.0
      %631 = vadd.xlane.f32.xlu0 %v630
      %v632 = vpop.xlane.xlu0 %631
      %v633 = vsel %vm425, %v410, 0.0
      %634 = vadd.xlane.f32.xlu0 %v633
      %v635 = vpop.xlane.xlu0 %634
      %v636 = vsel %vm425, %v411, 0.0
      %637 = vadd.xlane.f32.xlu0 %v636
      %v638 = vpop.xlane.xlu0 %637
      %v639 = vsel %vm425, %v412, 0.0
      %640 = vadd.xlane.f32.xlu0 %v639
      %v641 = vpop.xlane.xlu0 %640
      %v642 = vsel %vm425, %v413, 0.0
      %643 = vadd.xlane.f32.xlu0 %v642
      %v644 = vpop.xlane.xlu0 %643
      %v645 = vsel %vm425, %v414, 0.0
      %646 = vadd.xlane.f32.xlu0 %v645
      %v647 = vpop.xlane.xlu0 %646
      %v648 = vsel %vm425, %v415, 0.0
      %649 = vadd.xlane.f32.xlu0 %v648
      %v650 = vpop.xlane.xlu0 %649
      %v651 = vsel %vm425, %v416, 0.0
      %652 = vadd.xlane.f32.xlu0 %v651
      %v653 = vpop.xlane.xlu0 %652
      %v654 = vsel %vm425, %v417, 0.0
      %655 = vadd.xlane.f32.xlu0 %v654
      %v656 = vpop.xlane.xlu0 %655
      %v657 = vsel %vm425, %v418, 0.0
      %658 = vadd.xlane.f32.xlu0 %v657
      %v659 = vpop.xlane.xlu0 %658
      %v660 = vsel %vm425, %v419, 0.0
      %661 = vadd.xlane.f32.xlu0 %v660
      %v662 = vpop.xlane.xlu0 %661
      %v663 = vsel %vm425, %v420, 0.0
      %664 = vadd.xlane.f32.xlu0 %v663
      %v665 = vpop.xlane.xlu0 %664
      %v666 = vsel %vm425, %v421, 0.0
      %667 = vadd.xlane.f32.xlu0 %v666
      %v668 = vpop.xlane.xlu0 %667
      %v669 = vsel %vm425, %v422, 0.0
      %670 = vadd.xlane.f32.xlu0 %v669
      %v671 = vpop.xlane.xlu0 %670
      %v672 = vsel %vm425, %v423, 0.0
      %673 = vadd.xlane.f32.xlu0 %v672
      %v674 = vpop.xlane.xlu0 %673
      %v675 = vsel %vm425, %v424, 0.0
      %676 = vadd.xlane.f32.xlu0 %v675
      %v677 = vpop.xlane.xlu0 %676
      %v678 = vld [vmem:[%s234] sm:$0xff]
      %v679 = vld [vmem:[%s234 + $0x8] sm:$0xff]
      %v680 = vld [vmem:[%s234 + $0x10] sm:$0xff]
      %v681 = vld [vmem:[%s234 + $0x18] sm:$0xff]
      %v682 = vld [vmem:[%s234 + $0x20] sm:$0xff]
      %v683 = vld [vmem:[%s234 + $0x28] sm:$0xff]
      %v684 = vld [vmem:[%s234 + $0x30] sm:$0xff]
      %v685 = vld [vmem:[%s234 + $0x38] sm:$0xff]
      %v686 = vld [vmem:[%s234 + $0x40] sm:$0xff]
      %v687 = vld [vmem:[%s234 + $0x48] sm:$0xff]
      %v688 = vld [vmem:[%s234 + $0x50] sm:$0xff]
      %v689 = vld [vmem:[%s234 + $0x58] sm:$0xff]
      %v690 = vld [vmem:[%s234 + $0x60] sm:$0xff]
      %v691 = vld [vmem:[%s234 + $0x68] sm:$0xff]
      %v692 = vld [vmem:[%s234 + $0x70] sm:$0xff]
      %v693 = vld [vmem:[%s234 + $0x78] sm:$0xff]
      %v694 = vld [vmem:[%s234 + $0x80] sm:$0xff]
      %v695 = vld [vmem:[%s234 + $0x88] sm:$0xff]
      %v696 = vld [vmem:[%s234 + $0x90] sm:$0xff]
      %v697 = vld [vmem:[%s234 + $0x98] sm:$0xff]
      %v698 = vld [vmem:[%s234 + $0xa0] sm:$0xff]
      %v699 = vld [vmem:[%s234 + $0xa8] sm:$0xff]
      %v700 = vld [vmem:[%s234 + $0xb0] sm:$0xff]
      %v701 = vld [vmem:[%s234 + $0xb8] sm:$0xff]
      %v702 = vld [vmem:[%s234 + $0xc0] sm:$0xff]
      %v703 = vld [vmem:[%s234 + $0xc8] sm:$0xff]
      %v704 = vld [vmem:[%s234 + $0xd0] sm:$0xff]
      %v705 = vld [vmem:[%s234 + $0xd8] sm:$0xff]
      %v706 = vld [vmem:[%s234 + $0xe0] sm:$0xff]
      %v707 = vld [vmem:[%s234 + $0xe8] sm:$0xff]
      %v708 = vld [vmem:[%s234 + $0xf0] sm:$0xff]
      %v709 = vld [vmem:[%s234 + $0xf8] sm:$0xff]
      %v710 = vld [vmem:[%s234 + $0x100] sm:$0xff]
      %v711 = vld [vmem:[%s234 + $0x108] sm:$0xff]
      %v712 = vld [vmem:[%s234 + $0x110] sm:$0xff]
      %v713 = vld [vmem:[%s234 + $0x118] sm:$0xff]
      %v714 = vld [vmem:[%s234 + $0x120] sm:$0xff]
      %v715 = vld [vmem:[%s234 + $0x128] sm:$0xff]
      %v716 = vld [vmem:[%s234 + $0x130] sm:$0xff]
      %v717 = vld [vmem:[%s234 + $0x138] sm:$0xff]
      %v718 = vld [vmem:[%s234 + $0x140] sm:$0xff]
      %v719 = vld [vmem:[%s234 + $0x148] sm:$0xff]
      %v720 = vld [vmem:[%s234 + $0x150] sm:$0xff]
      %v721 = vld [vmem:[%s234 + $0x158] sm:$0xff]
      %v722 = vld [vmem:[%s234 + $0x160] sm:$0xff]
      %v723 = vld [vmem:[%s234 + $0x168] sm:$0xff]
      %v724 = vld [vmem:[%s234 + $0x170] sm:$0xff]
      %v725 = vld [vmem:[%s234 + $0x178] sm:$0xff]
      %v726 = vld [vmem:[%s234 + $0x180] sm:$0xff]
      %v727 = vld [vmem:[%s234 + $0x188] sm:$0xff]
      %v728 = vld [vmem:[%s234 + $0x190] sm:$0xff]
      %v729 = vld [vmem:[%s234 + $0x198] sm:$0xff]
      %v730 = vld [vmem:[%s234 + $0x1a0] sm:$0xff]
      %v731 = vld [vmem:[%s234 + $0x1a8] sm:$0xff]
      %v732 = vld [vmem:[%s234 + $0x1b0] sm:$0xff]
      %v733 = vld [vmem:[%s234 + $0x1b8] sm:$0xff]
      %v734 = vld [vmem:[%s234 + $0x1c0] sm:$0xff]
      %v735 = vld [vmem:[%s234 + $0x1c8] sm:$0xff]
      %v736 = vld [vmem:[%s234 + $0x1d0] sm:$0xff]
      %v737 = vld [vmem:[%s234 + $0x1d8] sm:$0xff]
      %v738 = vld [vmem:[%s234 + $0x1e0] sm:$0xff]
      %v739 = vld [vmem:[%s234 + $0x1e8] sm:$0xff]
      %v740 = vld [vmem:[%s234 + $0x1f0] sm:$0xff]
      %v741 = vld [vmem:[%s234 + $0x1f8] sm:$0xff]
      %v742 = vld [vmem:[%s234 + $0x200] sm:$0xff]
      %v743 = vld [vmem:[%s234 + $0x208] sm:$0xff]
      %v744 = vld [vmem:[%s234 + $0x210] sm:$0xff]
      %v745 = vld [vmem:[%s234 + $0x218] sm:$0xff]
      %v746 = vld [vmem:[%s234 + $0x220] sm:$0xff]
      %v747 = vld [vmem:[%s234 + $0x228] sm:$0xff]
      %v748 = vld [vmem:[%s234 + $0x230] sm:$0xff]
      %v749 = vld [vmem:[%s234 + $0x238] sm:$0xff]
      %v750 = vld [vmem:[%s234 + $0x240] sm:$0xff]
      %v751 = vld [vmem:[%s234 + $0x248] sm:$0xff]
      %v752 = vld [vmem:[%s234 + $0x250] sm:$0xff]
      %v753 = vld [vmem:[%s234 + $0x258] sm:$0xff]
      %v754 = vld [vmem:[%s234 + $0x260] sm:$0xff]
      %v755 = vld [vmem:[%s234 + $0x268] sm:$0xff]
      %v756 = vld [vmem:[%s234 + $0x270] sm:$0xff]
      %v757 = vld [vmem:[%s234 + $0x278] sm:$0xff]
      %v758 = vld [vmem:[%s234 + $0x280] sm:$0xff]
      %v759 = vld [vmem:[%s234 + $0x288] sm:$0xff]
      %v760 = vld [vmem:[%s234 + $0x290] sm:$0xff]
      %v761 = vld [vmem:[%s234 + $0x298] sm:$0xff]
      %v762 = vadd.f32 %v428, %v678
      %v763 = vadd.f32 %v431, %v679
      %v764 = vadd.f32 %v434, %v680
      %v765 = vadd.f32 %v437, %v681
      %v766 = vadd.f32 %v440, %v682
      %v767 = vadd.f32 %v443, %v683
      %v768 = vadd.f32 %v446, %v684
      %v769 = vadd.f32 %v449, %v685
      %v770 = vadd.f32 %v452, %v686
      %v771 = vadd.f32 %v455, %v687
      %v772 = vadd.f32 %v458, %v688
      %v773 = vadd.f32 %v461, %v689
      %v774 = vadd.f32 %v464, %v690
      %v775 = vadd.f32 %v467, %v691
      %v776 = vadd.f32 %v470, %v692
      %v777 = vadd.f32 %v473, %v693
      %v778 = vadd.f32 %v476, %v694
      %v779 = vadd.f32 %v479, %v695
      %v780 = vadd.f32 %v482, %v696
      %v781 = vadd.f32 %v485, %v697
      %v782 = vadd.f32 %v488, %v698
      %v783 = vadd.f32 %v491, %v699
      %v784 = vadd.f32 %v494, %v700
      %v785 = vadd.f32 %v497, %v701
      %v786 = vadd.f32 %v500, %v702
      %v787 = vadd.f32 %v503, %v703
      %v788 = vadd.f32 %v506, %v704
      %v789 = vadd.f32 %v509, %v705
      %v790 = vadd.f32 %v512, %v706
      %v791 = vadd.f32 %v515, %v707
      %v792 = vadd.f32 %v518, %v708
      %v793 = vadd.f32 %v521, %v709
      %v794 = vadd.f32 %v524, %v710
      %v795 = vadd.f32 %v527, %v711
      %v796 = vadd.f32 %v530, %v712
      %v797 = vadd.f32 %v533, %v713
      %v798 = vadd.f32 %v536, %v714
      %v799 = vadd.f32 %v539, %v715
      %v800 = vadd.f32 %v542, %v716
      %v801 = vadd.f32 %v545, %v717
      %v802 = vadd.f32 %v548, %v718
      %v803 = vadd.f32 %v551, %v719
      %v804 = vadd.f32 %v554, %v720
      %v805 = vadd.f32 %v557, %v721
      %v806 = vadd.f32 %v560, %v722
      %v807 = vadd.f32 %v563, %v723
      %v808 = vadd.f32 %v566, %v724
      %v809 = vadd.f32 %v569, %v725
      %v810 = vadd.f32 %v572, %v726
      %v811 = vadd.f32 %v575, %v727
      %v812 = vadd.f32 %v578, %v728
      %v813 = vadd.f32 %v581, %v729
      %v814 = vadd.f32 %v584, %v730
      %v815 = vadd.f32 %v587, %v731
      %v816 = vadd.f32 %v590, %v732
      %v817 = vadd.f32 %v593, %v733
      %v818 = vadd.f32 %v596, %v734
      %v819 = vadd.f32 %v599, %v735
      %v820 = vadd.f32 %v602, %v736
      %v821 = vadd.f32 %v605, %v737
      %v822 = vadd.f32 %v608, %v738
      %v823 = vadd.f32 %v611, %v739
      %v824 = vadd.f32 %v614, %v740
      %v825 = vadd.f32 %v617, %v741
      %v826 = vadd.f32 %v620, %v742
      %v827 = vadd.f32 %v623, %v743
      %v828 = vadd.f32 %v626, %v744
      %v829 = vadd.f32 %v629, %v745
      %v830 = vadd.f32 %v632, %v746
      %v831 = vadd.f32 %v635, %v747
      %v832 = vadd.f32 %v638, %v748
      %v833 = vadd.f32 %v641, %v749
      %v834 = vadd.f32 %v644, %v750
      %v835 = vadd.f32 %v647, %v751
      %v836 = vadd.f32 %v650, %v752
      %v837 = vadd.f32 %v653, %v753
      %v838 = vadd.f32 %v656, %v754
      %v839 = vadd.f32 %v659, %v755
      %v840 = vadd.f32 %v662, %v756
      %v841 = vadd.f32 %v665, %v757
      %v842 = vadd.f32 %v668, %v758
      %v843 = vadd.f32 %v671, %v759
      %v844 = vadd.f32 %v674, %v760
      %v845 = vadd.f32 %v677, %v761
      %v846 = vxor.u32 %v762, 2147483648
      %v847 = vxor.u32 %v763, 2147483648
      %v848 = vxor.u32 %v764, 2147483648
      %v849 = vxor.u32 %v765, 2147483648
      %v850 = vxor.u32 %v766, 2147483648
      %v851 = vxor.u32 %v767, 2147483648
      %v852 = vxor.u32 %v768, 2147483648
      %v853 = vxor.u32 %v769, 2147483648
      %v854 = vxor.u32 %v770, 2147483648
      %v855 = vxor.u32 %v771, 2147483648
      %v856 = vxor.u32 %v772, 2147483648
      %v857 = vxor.u32 %v773, 2147483648
      %v858 = vxor.u32 %v774, 2147483648
      %v859 = vxor.u32 %v775, 2147483648
      %v860 = vxor.u32 %v776, 2147483648
      %v861 = vxor.u32 %v777, 2147483648
      %v862 = vxor.u32 %v778, 2147483648
      %v863 = vxor.u32 %v779, 2147483648
      %v864 = vxor.u32 %v780, 2147483648
      %v865 = vxor.u32 %v781, 2147483648
      %v866 = vxor.u32 %v782, 2147483648
      %v867 = vxor.u32 %v783, 2147483648
      %v868 = vxor.u32 %v784, 2147483648
      %v869 = vxor.u32 %v785, 2147483648
      %v870 = vxor.u32 %v786, 2147483648
      %v871 = vxor.u32 %v787, 2147483648
      %v872 = vxor.u32 %v788, 2147483648
      %v873 = vxor.u32 %v789, 2147483648
      %v874 = vxor.u32 %v790, 2147483648
      %v875 = vxor.u32 %v791, 2147483648
      %v876 = vxor.u32 %v792, 2147483648
      %v877 = vxor.u32 %v793, 2147483648
      %v878 = vxor.u32 %v794, 2147483648
      %v879 = vxor.u32 %v795, 2147483648
      %v880 = vxor.u32 %v796, 2147483648
      %v881 = vxor.u32 %v797, 2147483648
      %v882 = vxor.u32 %v798, 2147483648
      %v883 = vxor.u32 %v799, 2147483648
      %v884 = vxor.u32 %v800, 2147483648
      %v885 = vxor.u32 %v801, 2147483648
      %v886 = vxor.u32 %v802, 2147483648
      %v887 = vxor.u32 %v803, 2147483648
      %v888 = vxor.u32 %v804, 2147483648
      %v889 = vxor.u32 %v805, 2147483648
      %v890 = vxor.u32 %v806, 2147483648
      %v891 = vxor.u32 %v807, 2147483648
      %v892 = vxor.u32 %v808, 2147483648
      %v893 = vxor.u32 %v809, 2147483648
      %v894 = vxor.u32 %v810, 2147483648
      %v895 = vxor.u32 %v811, 2147483648
      %v896 = vxor.u32 %v812, 2147483648
      %v897 = vxor.u32 %v813, 2147483648
      %v898 = vxor.u32 %v814, 2147483648
      %v899 = vxor.u32 %v815, 2147483648
      %v900 = vxor.u32 %v816, 2147483648
      %v901 = vxor.u32 %v817, 2147483648
      %v902 = vxor.u32 %v818, 2147483648
      %v903 = vxor.u32 %v819, 2147483648
      %v904 = vxor.u32 %v820, 2147483648
      %v905 = vxor.u32 %v821, 2147483648
      %v906 = vxor.u32 %v822, 2147483648
      %v907 = vxor.u32 %v823, 2147483648
      %v908 = vxor.u32 %v824, 2147483648
      %v909 = vxor.u32 %v825, 2147483648
      %v910 = vxor.u32 %v826, 2147483648
      %v911 = vxor.u32 %v827, 2147483648
      %v912 = vxor.u32 %v828, 2147483648
      %v913 = vxor.u32 %v829, 2147483648
      %v914 = vxor.u32 %v830, 2147483648
      %v915 = vxor.u32 %v831, 2147483648
      %v916 = vxor.u32 %v832, 2147483648
      %v917 = vxor.u32 %v833, 2147483648
      %v918 = vxor.u32 %v834, 2147483648
      %v919 = vxor.u32 %v835, 2147483648
      %v920 = vxor.u32 %v836, 2147483648
      %v921 = vxor.u32 %v837, 2147483648
      %v922 = vxor.u32 %v838, 2147483648
      %v923 = vxor.u32 %v839, 2147483648
      %v924 = vxor.u32 %v840, 2147483648
      %v925 = vxor.u32 %v841, 2147483648
      %v926 = vxor.u32 %v842, 2147483648
      %v927 = vxor.u32 %v843, 2147483648
      %v928 = vxor.u32 %v844, 2147483648
      %v929 = vxor.u32 %v845, 2147483648
      %v930 = vmul.f32 %v846, 1.442695
      %v931 = vpow.pop %v930
      %v932 = vmul.f32 %v847, 1.442695
      %v933 = vpow.pop %v932
      %v934 = vmul.f32 %v848, 1.442695
      %v935 = vpow.pop %v934
      %v936 = vmul.f32 %v849, 1.442695
      %v937 = vpow.pop %v936
      %v938 = vmul.f32 %v850, 1.442695
      %v939 = vpow.pop %v938
      %v940 = vmul.f32 %v851, 1.442695
      %v941 = vpow.pop %v940
      %v942 = vmul.f32 %v852, 1.442695
      %v943 = vpow.pop %v942
      %v944 = vmul.f32 %v853, 1.442695
      %v945 = vpow.pop %v944
      %v946 = vmul.f32 %v854, 1.442695
      %v947 = vpow.pop %v946
      %v948 = vmul.f32 %v855, 1.442695
      %v949 = vpow.pop %v948
      %v950 = vmul.f32 %v856, 1.442695
      %v951 = vpow.pop %v950
      %v952 = vmul.f32 %v857, 1.442695
      %v953 = vpow.pop %v952
      %v954 = vmul.f32 %v858, 1.442695
      %v955 = vpow.pop %v954
      %v956 = vmul.f32 %v859, 1.442695
      %v957 = vpow.pop %v956
      %v958 = vmul.f32 %v860, 1.442695
      %v959 = vpow.pop %v958
      %v960 = vmul.f32 %v861, 1.442695
      %v961 = vpow.pop %v960
      %v962 = vmul.f32 %v862, 1.442695
      %v963 = vpow.pop %v962
      %v964 = vmul.f32 %v863, 1.442695
      %v965 = vpow.pop %v964
      %v966 = vmul.f32 %v864, 1.442695
      %v967 = vpow.pop %v966
      %v968 = vmul.f32 %v865, 1.442695
      %v969 = vpow.pop %v968
      %v970 = vmul.f32 %v866, 1.442695
      %v971 = vpow.pop %v970
      %v972 = vmul.f32 %v867, 1.442695
      %v973 = vpow.pop %v972
      %v974 = vmul.f32 %v868, 1.442695
      %v975 = vpow.pop %v974
      %v976 = vmul.f32 %v869, 1.442695
      %v977 = vpow.pop %v976
      %v978 = vmul.f32 %v870, 1.442695
      %v979 = vpow.pop %v978
      %v980 = vmul.f32 %v871, 1.442695
      %v981 = vpow.pop %v980
      %v982 = vmul.f32 %v872, 1.442695
      %v983 = vpow.pop %v982
      %v984 = vmul.f32 %v873, 1.442695
      %v985 = vpow.pop %v984
      %v986 = vmul.f32 %v874, 1.442695
      %v987 = vpow.pop %v986
      %v988 = vmul.f32 %v875, 1.442695
      %v989 = vpow.pop %v988
      %v990 = vmul.f32 %v876, 1.442695
      %v991 = vpow.pop %v990
      %v992 = vmul.f32 %v877, 1.442695
      %v993 = vpow.pop %v992
      %v994 = vmul.f32 %v878, 1.442695
      %v995 = vpow.pop %v994
      %v996 = vmul.f32 %v879, 1.442695
      %v997 = vpow.pop %v996
      %v998 = vmul.f32 %v880, 1.442695
      %v999 = vpow.pop %v998
      %v1000 = vmul.f32 %v881, 1.442695
      %v1001 = vpow.pop %v1000
      %v1002 = vmul.f32 %v882, 1.442695
      %v1003 = vpow.pop %v1002
      %v1004 = vmul.f32 %v883, 1.442695
      %v1005 = vpow.pop %v1004
      %v1006 = vmul.f32 %v884, 1.442695
      %v1007 = vpow.pop %v1006
      %v1008 = vmul.f32 %v885, 1.442695
      %v1009 = vpow.pop %v1008
      %v1010 = vmul.f32 %v886, 1.442695
      %v1011 = vpow.pop %v1010
      %v1012 = vmul.f32 %v887, 1.442695
      %v1013 = vpow.pop %v1012
      %v1014 = vmul.f32 %v888, 1.442695
      %v1015 = vpow.pop %v1014
      %v1016 = vmul.f32 %v889, 1.442695
      %v1017 = vpow.pop %v1016
      %v1018 = vmul.f32 %v890, 1.442695
      %v1019 = vpow.pop %v1018
      %v1020 = vmul.f32 %v891, 1.442695
      %v1021 = vpow.pop %v1020
      %v1022 = vmul.f32 %v892, 1.442695
      %v1023 = vpow.pop %v1022
      %v1024 = vmul.f32 %v893, 1.442695
      %v1025 = vpow.pop %v1024
      %v1026 = vmul.f32 %v894, 1.442695
      %v1027 = vpow.pop %v1026
      %v1028 = vmul.f32 %v895, 1.442695
      %v1029 = vpow.pop %v1028
      %v1030 = vmul.f32 %v896, 1.442695
      %v1031 = vpow.pop %v1030
      %v1032 = vmul.f32 %v897, 1.442695
      %v1033 = vpow.pop %v1032
      %v1034 = vmul.f32 %v898, 1.442695
      %v1035 = vpow.pop %v1034
      %v1036 = vmul.f32 %v899, 1.442695
      %v1037 = vpow.pop %v1036
      %v1038 = vmul.f32 %v900, 1.442695
      %v1039 = vpow.pop %v1038
      %v1040 = vmul.f32 %v901, 1.442695
      %v1041 = vpow.pop %v1040
      %v1042 = vmul.f32 %v902, 1.442695
      %v1043 = vpow.pop %v1042
      %v1044 = vmul.f32 %v903, 1.442695
      %v1045 = vpow.pop %v1044
      %v1046 = vmul.f32 %v904, 1.442695
      %v1047 = vpow.pop %v1046
      %v1048 = vmul.f32 %v905, 1.442695
      %v1049 = vpow.pop %v1048
      %v1050 = vmul.f32 %v906, 1.442695
      %v1051 = vpow.pop %v1050
      %v1052 = vmul.f32 %v907, 1.442695
      %v1053 = vpow.pop %v1052
      %v1054 = vmul.f32 %v908, 1.442695
      %v1055 = vpow.pop %v1054
      %v1056 = vmul.f32 %v909, 1.442695
      %v1057 = vpow.pop %v1056
      %v1058 = vmul.f32 %v910, 1.442695
      %v1059 = vpow.pop %v1058
      %v1060 = vmul.f32 %v911, 1.442695
      %v1061 = vpow.pop %v1060
      %v1062 = vmul.f32 %v912, 1.442695
      %v1063 = vpow.pop %v1062
      %v1064 = vmul.f32 %v913, 1.442695
      %v1065 = vpow.pop %v1064
      %v1066 = vmul.f32 %v914, 1.442695
      %v1067 = vpow.pop %v1066
      %v1068 = vmul.f32 %v915, 1.442695
      %v1069 = vpow.pop %v1068
      %v1070 = vmul.f32 %v916, 1.442695
      %v1071 = vpow.pop %v1070
      %v1072 = vmul.f32 %v917, 1.442695
      %v1073 = vpow.pop %v1072
      %v1074 = vmul.f32 %v918, 1.442695
      %v1075 = vpow.pop %v1074
      %v1076 = vmul.f32 %v919, 1.442695
      %v1077 = vpow.pop %v1076
      %v1078 = vmul.f32 %v920, 1.442695
      %v1079 = vpow.pop %v1078
      %v1080 = vmul.f32 %v921, 1.442695
      %v1081 = vpow.pop %v1080
      %v1082 = vmul.f32 %v922, 1.442695
      %v1083 = vpow.pop %v1082
      %v1084 = vmul.f32 %v923, 1.442695
      %v1085 = vpow.pop %v1084
      %v1086 = vmul.f32 %v924, 1.442695
      %v1087 = vpow.pop %v1086
      %v1088 = vmul.f32 %v925, 1.442695
      %v1089 = vpow.pop %v1088
      %v1090 = vmul.f32 %v926, 1.442695
      %v1091 = vpow.pop %v1090
      %v1092 = vmul.f32 %v927, 1.442695
      %v1093 = vpow.pop %v1092
      %v1094 = vmul.f32 %v928, 1.442695
      %v1095 = vpow.pop %v1094
      %v1096 = vmul.f32 %v929, 1.442695
      %v1097 = vpow.pop %v1096
      %v1098 = vadd.f32 %v931, 1.0
      %v1099 = vadd.f32 %v933, 1.0
      %v1100 = vadd.f32 %v935, 1.0
      %v1101 = vadd.f32 %v937, 1.0
      %v1102 = vadd.f32 %v939, 1.0
      %v1103 = vadd.f32 %v941, 1.0
      %v1104 = vadd.f32 %v943, 1.0
      %v1105 = vadd.f32 %v945, 1.0
      %v1106 = vadd.f32 %v947, 1.0
      %v1107 = vadd.f32 %v949, 1.0
      %v1108 = vadd.f32 %v951, 1.0
      %v1109 = vadd.f32 %v953, 1.0
      %v1110 = vadd.f32 %v955, 1.0
      %v1111 = vadd.f32 %v957, 1.0
      %v1112 = vadd.f32 %v959, 1.0
      %v1113 = vadd.f32 %v961, 1.0
      %v1114 = vadd.f32 %v963, 1.0
      %v1115 = vadd.f32 %v965, 1.0
      %v1116 = vadd.f32 %v967, 1.0
      %v1117 = vadd.f32 %v969, 1.0
      %v1118 = vadd.f32 %v971, 1.0
      %v1119 = vadd.f32 %v973, 1.0
      %v1120 = vadd.f32 %v975, 1.0
      %v1121 = vadd.f32 %v977, 1.0
      %v1122 = vadd.f32 %v979, 1.0
      %v1123 = vadd.f32 %v981, 1.0
      %v1124 = vadd.f32 %v983, 1.0
      %v1125 = vadd.f32 %v985, 1.0
      %v1126 = vadd.f32 %v987, 1.0
      %v1127 = vadd.f32 %v989, 1.0
      %v1128 = vadd.f32 %v991, 1.0
      %v1129 = vadd.f32 %v993, 1.0
      %v1130 = vadd.f32 %v995, 1.0
      %v1131 = vadd.f32 %v997, 1.0
      %v1132 = vadd.f32 %v999, 1.0
      %v1133 = vadd.f32 %v1001, 1.0
      %v1134 = vadd.f32 %v1003, 1.0
      %v1135 = vadd.f32 %v1005, 1.0
      %v1136 = vadd.f32 %v1007, 1.0
      %v1137 = vadd.f32 %v1009, 1.0
      %v1138 = vadd.f32 %v1011, 1.0
      %v1139 = vadd.f32 %v1013, 1.0
      %v1140 = vadd.f32 %v1015, 1.0
      %v1141 = vadd.f32 %v1017, 1.0
      %v1142 = vadd.f32 %v1019, 1.0
      %v1143 = vadd.f32 %v1021, 1.0
      %v1144 = vadd.f32 %v1023, 1.0
      %v1145 = vadd.f32 %v1025, 1.0
      %v1146 = vadd.f32 %v1027, 1.0
      %v1147 = vadd.f32 %v1029, 1.0
      %v1148 = vadd.f32 %v1031, 1.0
      %v1149 = vadd.f32 %v1033, 1.0
      %v1150 = vadd.f32 %v1035, 1.0
      %v1151 = vadd.f32 %v1037, 1.0
      %v1152 = vadd.f32 %v1039, 1.0
      %v1153 = vadd.f32 %v1041, 1.0
      %v1154 = vadd.f32 %v1043, 1.0
      %v1155 = vadd.f32 %v1045, 1.0
      %v1156 = vadd.f32 %v1047, 1.0
      %v1157 = vadd.f32 %v1049, 1.0
      %v1158 = vadd.f32 %v1051, 1.0
      %v1159 = vadd.f32 %v1053, 1.0
      %v1160 = vadd.f32 %v1055, 1.0
      %v1161 = vadd.f32 %v1057, 1.0
      %v1162 = vadd.f32 %v1059, 1.0
      %v1163 = vadd.f32 %v1061, 1.0
      %v1164 = vadd.f32 %v1063, 1.0
      %v1165 = vadd.f32 %v1065, 1.0
      %v1166 = vadd.f32 %v1067, 1.0
      %v1167 = vadd.f32 %v1069, 1.0
      %v1168 = vadd.f32 %v1071, 1.0
      %v1169 = vadd.f32 %v1073, 1.0
      %v1170 = vadd.f32 %v1075, 1.0
      %v1171 = vadd.f32 %v1077, 1.0
      %v1172 = vadd.f32 %v1079, 1.0
      %v1173 = vadd.f32 %v1081, 1.0
      %v1174 = vadd.f32 %v1083, 1.0
      %v1175 = vadd.f32 %v1085, 1.0
      %v1176 = vadd.f32 %v1087, 1.0
      %v1177 = vadd.f32 %v1089, 1.0
      %v1178 = vadd.f32 %v1091, 1.0
      %v1179 = vadd.f32 %v1093, 1.0
      %v1180 = vadd.f32 %v1095, 1.0
      %v1181 = vadd.f32 %v1097, 1.0
      %v1182 = vrcp.pop %v1098
      %v1183 = vmul.f32 1.0, %v1182
      %v1184 = vrcp.pop %v1099
      %v1185 = vmul.f32 1.0, %v1184
      %v1186 = vrcp.pop %v1100
      %v1187 = vmul.f32 1.0, %v1186
      %v1188 = vrcp.pop %v1101
      %v1189 = vmul.f32 1.0, %v1188
      %v1190 = vrcp.pop %v1102
      %v1191 = vmul.f32 1.0, %v1190
      %v1192 = vrcp.pop %v1103
      %v1193 = vmul.f32 1.0, %v1192
      %v1194 = vrcp.pop %v1104
      %v1195 = vmul.f32 1.0, %v1194
      %v1196 = vrcp.pop %v1105
      %v1197 = vmul.f32 1.0, %v1196
      %v1198 = vrcp.pop %v1106
      %v1199 = vmul.f32 1.0, %v1198
      %v1200 = vrcp.pop %v1107
      %v1201 = vmul.f32 1.0, %v1200
      %v1202 = vrcp.pop %v1108
      %v1203 = vmul.f32 1.0, %v1202
      %v1204 = vrcp.pop %v1109
      %v1205 = vmul.f32 1.0, %v1204
      %v1206 = vrcp.pop %v1110
      %v1207 = vmul.f32 1.0, %v1206
      %v1208 = vrcp.pop %v1111
      %v1209 = vmul.f32 1.0, %v1208
      %v1210 = vrcp.pop %v1112
      %v1211 = vmul.f32 1.0, %v1210
      %v1212 = vrcp.pop %v1113
      %v1213 = vmul.f32 1.0, %v1212
      %v1214 = vrcp.pop %v1114
      %v1215 = vmul.f32 1.0, %v1214
      %v1216 = vrcp.pop %v1115
      %v1217 = vmul.f32 1.0, %v1216
      %v1218 = vrcp.pop %v1116
      %v1219 = vmul.f32 1.0, %v1218
      %v1220 = vrcp.pop %v1117
      %v1221 = vmul.f32 1.0, %v1220
      %v1222 = vrcp.pop %v1118
      %v1223 = vmul.f32 1.0, %v1222
      %v1224 = vrcp.pop %v1119
      %v1225 = vmul.f32 1.0, %v1224
      %v1226 = vrcp.pop %v1120
      %v1227 = vmul.f32 1.0, %v1226
      %v1228 = vrcp.pop %v1121
      %v1229 = vmul.f32 1.0, %v1228
      %v1230 = vrcp.pop %v1122
      %v1231 = vmul.f32 1.0, %v1230
      %v1232 = vrcp.pop %v1123
      %v1233 = vmul.f32 1.0, %v1232
      %v1234 = vrcp.pop %v1124
      %v1235 = vmul.f32 1.0, %v1234
      %v1236 = vrcp.pop %v1125
      %v1237 = vmul.f32 1.0, %v1236
      %v1238 = vrcp.pop %v1126
      %v1239 = vmul.f32 1.0, %v1238
      %v1240 = vrcp.pop %v1127
      %v1241 = vmul.f32 1.0, %v1240
      %v1242 = vrcp.pop %v1128
      %v1243 = vmul.f32 1.0, %v1242
      %v1244 = vrcp.pop %v1129
      %v1245 = vmul.f32 1.0, %v1244
      %v1246 = vrcp.pop %v1130
      %v1247 = vmul.f32 1.0, %v1246
      %v1248 = vrcp.pop %v1131
      %v1249 = vmul.f32 1.0, %v1248
      %v1250 = vrcp.pop %v1132
      %v1251 = vmul.f32 1.0, %v1250
      %v1252 = vrcp.pop %v1133
      %v1253 = vmul.f32 1.0, %v1252
      %v1254 = vrcp.pop %v1134
      %v1255 = vmul.f32 1.0, %v1254
      %v1256 = vrcp.pop %v1135
      %v1257 = vmul.f32 1.0, %v1256
      %v1258 = vrcp.pop %v1136
      %v1259 = vmul.f32 1.0, %v1258
      %v1260 = vrcp.pop %v1137
      %v1261 = vmul.f32 1.0, %v1260
      %v1262 = vrcp.pop %v1138
      %v1263 = vmul.f32 1.0, %v1262
      %v1264 = vrcp.pop %v1139
      %v1265 = vmul.f32 1.0, %v1264
      %v1266 = vrcp.pop %v1140
      %v1267 = vmul.f32 1.0, %v1266
      %v1268 = vrcp.pop %v1141
      %v1269 = vmul.f32 1.0, %v1268
      %v1270 = vrcp.pop %v1142
      %v1271 = vmul.f32 1.0, %v1270
      %v1272 = vrcp.pop %v1143
      %v1273 = vmul.f32 1.0, %v1272
      %v1274 = vrcp.pop %v1144
      %v1275 = vmul.f32 1.0, %v1274
      %v1276 = vrcp.pop %v1145
      %v1277 = vmul.f32 1.0, %v1276
      %v1278 = vrcp.pop %v1146
      %v1279 = vmul.f32 1.0, %v1278
      %v1280 = vrcp.pop %v1147
      %v1281 = vmul.f32 1.0, %v1280
      %v1282 = vrcp.pop %v1148
      %v1283 = vmul.f32 1.0, %v1282
      %v1284 = vrcp.pop %v1149
      %v1285 = vmul.f32 1.0, %v1284
      %v1286 = vrcp.pop %v1150
      %v1287 = vmul.f32 1.0, %v1286
      %v1288 = vrcp.pop %v1151
      %v1289 = vmul.f32 1.0, %v1288
      %v1290 = vrcp.pop %v1152
      %v1291 = vmul.f32 1.0, %v1290
      %v1292 = vrcp.pop %v1153
      %v1293 = vmul.f32 1.0, %v1292
      %v1294 = vrcp.pop %v1154
      %v1295 = vmul.f32 1.0, %v1294
      %v1296 = vrcp.pop %v1155
      %v1297 = vmul.f32 1.0, %v1296
      %v1298 = vrcp.pop %v1156
      %v1299 = vmul.f32 1.0, %v1298
      %v1300 = vrcp.pop %v1157
      %v1301 = vmul.f32 1.0, %v1300
      %v1302 = vrcp.pop %v1158
      %v1303 = vmul.f32 1.0, %v1302
      %v1304 = vrcp.pop %v1159
      %v1305 = vmul.f32 1.0, %v1304
      %v1306 = vrcp.pop %v1160
      %v1307 = vmul.f32 1.0, %v1306
      %v1308 = vrcp.pop %v1161
      %v1309 = vmul.f32 1.0, %v1308
      %v1310 = vrcp.pop %v1162
      %v1311 = vmul.f32 1.0, %v1310
      %v1312 = vrcp.pop %v1163
      %v1313 = vmul.f32 1.0, %v1312
      %v1314 = vrcp.pop %v1164
      %v1315 = vmul.f32 1.0, %v1314
      %v1316 = vrcp.pop %v1165
      %v1317 = vmul.f32 1.0, %v1316
      %v1318 = vrcp.pop %v1166
      %v1319 = vmul.f32 1.0, %v1318
      %v1320 = vrcp.pop %v1167
      %v1321 = vmul.f32 1.0, %v1320
      %v1322 = vrcp.pop %v1168
      %v1323 = vmul.f32 1.0, %v1322
      %v1324 = vrcp.pop %v1169
      %v1325 = vmul.f32 1.0, %v1324
      %v1326 = vrcp.pop %v1170
      %v1327 = vmul.f32 1.0, %v1326
      %v1328 = vrcp.pop %v1171
      %v1329 = vmul.f32 1.0, %v1328
      %v1330 = vrcp.pop %v1172
      %v1331 = vmul.f32 1.0, %v1330
      %v1332 = vrcp.pop %v1173
      %v1333 = vmul.f32 1.0, %v1332
      %v1334 = vrcp.pop %v1174
      %v1335 = vmul.f32 1.0, %v1334
      %v1336 = vrcp.pop %v1175
      %v1337 = vmul.f32 1.0, %v1336
      %v1338 = vrcp.pop %v1176
      %v1339 = vmul.f32 1.0, %v1338
      %v1340 = vrcp.pop %v1177
      %v1341 = vmul.f32 1.0, %v1340
      %v1342 = vrcp.pop %v1178
      %v1343 = vmul.f32 1.0, %v1342
      %v1344 = vrcp.pop %v1179
      %v1345 = vmul.f32 1.0, %v1344
      %v1346 = vrcp.pop %v1180
      %v1347 = vmul.f32 1.0, %v1346
      %v1348 = vrcp.pop %v1181
      %v1349 = vmul.f32 1.0, %v1348
      %v1350 = vld [vmem:[%s241] sm:$0xff]
      %v1351 = vld [vmem:[%s241 + $0x8] sm:$0xff]
      %v1352 = vld [vmem:[%s241 + $0x10] sm:$0xff]
      %v1353 = vld [vmem:[%s241 + $0x18] sm:$0xff]
      %v1354 = vld [vmem:[%s241 + $0x20] sm:$0xff]
      %v1355 = vld [vmem:[%s241 + $0x28] sm:$0xff]
      %v1356 = vld [vmem:[%s241 + $0x30] sm:$0xff]
      %v1357 = vld [vmem:[%s241 + $0x38] sm:$0xff]
      %v1358 = vld [vmem:[%s241 + $0x40] sm:$0xff]
      %v1359 = vld [vmem:[%s241 + $0x48] sm:$0xff]
      %v1360 = vld [vmem:[%s241 + $0x50] sm:$0xff]
      %v1361 = vld [vmem:[%s241 + $0x58] sm:$0xff]
      %v1362 = vld [vmem:[%s241 + $0x60] sm:$0xff]
      %v1363 = vld [vmem:[%s241 + $0x68] sm:$0xff]
      %v1364 = vld [vmem:[%s241 + $0x70] sm:$0xff]
      %v1365 = vld [vmem:[%s241 + $0x78] sm:$0xff]
      %v1366 = vld [vmem:[%s241 + $0x80] sm:$0xff]
      %v1367 = vld [vmem:[%s241 + $0x88] sm:$0xff]
      %v1368 = vld [vmem:[%s241 + $0x90] sm:$0xff]
      %v1369 = vld [vmem:[%s241 + $0x98] sm:$0xff]
      %v1370 = vld [vmem:[%s241 + $0xa0] sm:$0xff]
      %v1371 = vld [vmem:[%s241 + $0xa8] sm:$0xff]
      %v1372 = vld [vmem:[%s241 + $0xb0] sm:$0xff]
      %v1373 = vld [vmem:[%s241 + $0xb8] sm:$0xff]
      %v1374 = vld [vmem:[%s241 + $0xc0] sm:$0xff]
      %v1375 = vld [vmem:[%s241 + $0xc8] sm:$0xff]
      %v1376 = vld [vmem:[%s241 + $0xd0] sm:$0xff]
      %v1377 = vld [vmem:[%s241 + $0xd8] sm:$0xff]
      %v1378 = vld [vmem:[%s241 + $0xe0] sm:$0xff]
      %v1379 = vld [vmem:[%s241 + $0xe8] sm:$0xff]
      %v1380 = vld [vmem:[%s241 + $0xf0] sm:$0xff]
      %v1381 = vld [vmem:[%s241 + $0xf8] sm:$0xff]
      %v1382 = vld [vmem:[%s241 + $0x100] sm:$0xff]
      %v1383 = vld [vmem:[%s241 + $0x108] sm:$0xff]
      %v1384 = vld [vmem:[%s241 + $0x110] sm:$0xff]
      %v1385 = vld [vmem:[%s241 + $0x118] sm:$0xff]
      %v1386 = vld [vmem:[%s241 + $0x120] sm:$0xff]
      %v1387 = vld [vmem:[%s241 + $0x128] sm:$0xff]
      %v1388 = vld [vmem:[%s241 + $0x130] sm:$0xff]
      %v1389 = vld [vmem:[%s241 + $0x138] sm:$0xff]
      %v1390 = vld [vmem:[%s241 + $0x140] sm:$0xff]
      %v1391 = vld [vmem:[%s241 + $0x148] sm:$0xff]
      %v1392 = vld [vmem:[%s241 + $0x150] sm:$0xff]
      %v1393 = vld [vmem:[%s241 + $0x158] sm:$0xff]
      %v1394 = vld [vmem:[%s241 + $0x160] sm:$0xff]
      %v1395 = vld [vmem:[%s241 + $0x168] sm:$0xff]
      %v1396 = vld [vmem:[%s241 + $0x170] sm:$0xff]
      %v1397 = vld [vmem:[%s241 + $0x178] sm:$0xff]
      %v1398 = vld [vmem:[%s241 + $0x180] sm:$0xff]
      %v1399 = vld [vmem:[%s241 + $0x188] sm:$0xff]
      %v1400 = vld [vmem:[%s241 + $0x190] sm:$0xff]
      %v1401 = vld [vmem:[%s241 + $0x198] sm:$0xff]
      %v1402 = vld [vmem:[%s241 + $0x1a0] sm:$0xff]
      %v1403 = vld [vmem:[%s241 + $0x1a8] sm:$0xff]
      %v1404 = vld [vmem:[%s241 + $0x1b0] sm:$0xff]
      %v1405 = vld [vmem:[%s241 + $0x1b8] sm:$0xff]
      %v1406 = vld [vmem:[%s241 + $0x1c0] sm:$0xff]
      %v1407 = vld [vmem:[%s241 + $0x1c8] sm:$0xff]
      %v1408 = vld [vmem:[%s241 + $0x1d0] sm:$0xff]
      %v1409 = vld [vmem:[%s241 + $0x1d8] sm:$0xff]
      %v1410 = vld [vmem:[%s241 + $0x1e0] sm:$0xff]
      %v1411 = vld [vmem:[%s241 + $0x1e8] sm:$0xff]
      %v1412 = vld [vmem:[%s241 + $0x1f0] sm:$0xff]
      %v1413 = vld [vmem:[%s241 + $0x1f8] sm:$0xff]
      %v1414 = vld [vmem:[%s241 + $0x200] sm:$0xff]
      %v1415 = vld [vmem:[%s241 + $0x208] sm:$0xff]
      %v1416 = vld [vmem:[%s241 + $0x210] sm:$0xff]
      %v1417 = vld [vmem:[%s241 + $0x218] sm:$0xff]
      %v1418 = vld [vmem:[%s241 + $0x220] sm:$0xff]
      %v1419 = vld [vmem:[%s241 + $0x228] sm:$0xff]
      %v1420 = vld [vmem:[%s241 + $0x230] sm:$0xff]
      %v1421 = vld [vmem:[%s241 + $0x238] sm:$0xff]
      %v1422 = vld [vmem:[%s241 + $0x240] sm:$0xff]
      %v1423 = vld [vmem:[%s241 + $0x248] sm:$0xff]
      %v1424 = vld [vmem:[%s241 + $0x250] sm:$0xff]
      %v1425 = vld [vmem:[%s241 + $0x258] sm:$0xff]
      %v1426 = vld [vmem:[%s241 + $0x260] sm:$0xff]
      %v1427 = vld [vmem:[%s241 + $0x268] sm:$0xff]
      %v1428 = vld [vmem:[%s241 + $0x270] sm:$0xff]
      %v1429 = vld [vmem:[%s241 + $0x278] sm:$0xff]
      %v1430 = vld [vmem:[%s241 + $0x280] sm:$0xff]
      %v1431 = vld [vmem:[%s241 + $0x288] sm:$0xff]
      %v1432 = vld [vmem:[%s241 + $0x290] sm:$0xff]
      %v1433 = vld [vmem:[%s241 + $0x298] sm:$0xff]
      %v1434 = vld [vmem:[%s241 + $0x2a0] sm:$0xff]
      %v1435 = vld [vmem:[%s241 + $0x2a8] sm:$0xff]
      %v1436 = vld [vmem:[%s241 + $0x2b0] sm:$0xff]
      %v1437 = vld [vmem:[%s241 + $0x2b8] sm:$0xff]
      %v1438 = vld [vmem:[%s241 + $0x2c0] sm:$0xff]
      %v1439 = vld [vmem:[%s241 + $0x2c8] sm:$0xff]
      %v1440 = vld [vmem:[%s241 + $0x2d0] sm:$0xff]
      %v1441 = vld [vmem:[%s241 + $0x2d8] sm:$0xff]
      %v1442 = vld [vmem:[%s241 + $0x2e0] sm:$0xff]
      %v1443 = vld [vmem:[%s241 + $0x2e8] sm:$0xff]
      %v1444 = vld [vmem:[%s241 + $0x2f0] sm:$0xff]
      %v1445 = vld [vmem:[%s241 + $0x2f8] sm:$0xff]
      %v1446 = vld [vmem:[%s241 + $0x300] sm:$0xff]
      %v1447 = vld [vmem:[%s241 + $0x308] sm:$0xff]
      %v1448 = vld [vmem:[%s241 + $0x310] sm:$0xff]
      %v1449 = vld [vmem:[%s241 + $0x318] sm:$0xff]
      %v1450 = vld [vmem:[%s241 + $0x320] sm:$0xff]
      %v1451 = vld [vmem:[%s241 + $0x328] sm:$0xff]
      %v1452 = vld [vmem:[%s241 + $0x330] sm:$0xff]
      %v1453 = vld [vmem:[%s241 + $0x338] sm:$0xff]
      %v1454 = vld [vmem:[%s241 + $0x340] sm:$0xff]
      %v1455 = vld [vmem:[%s241 + $0x348] sm:$0xff]
      %v1456 = vld [vmem:[%s241 + $0x350] sm:$0xff]
      %v1457 = vld [vmem:[%s241 + $0x358] sm:$0xff]
      %v1458 = vld [vmem:[%s241 + $0x360] sm:$0xff]
      %v1459 = vld [vmem:[%s241 + $0x368] sm:$0xff]
      %v1460 = vld [vmem:[%s241 + $0x370] sm:$0xff]
      %v1461 = vld [vmem:[%s241 + $0x378] sm:$0xff]
      %v1462 = vld [vmem:[%s241 + $0x380] sm:$0xff]
      %v1463 = vld [vmem:[%s241 + $0x388] sm:$0xff]
      %v1464 = vld [vmem:[%s241 + $0x390] sm:$0xff]
      %v1465 = vld [vmem:[%s241 + $0x398] sm:$0xff]
      %v1466 = vld [vmem:[%s241 + $0x3a0] sm:$0xff]
      %v1467 = vld [vmem:[%s241 + $0x3a8] sm:$0xff]
      %v1468 = vld [vmem:[%s241 + $0x3b0] sm:$0xff]
      %v1469 = vld [vmem:[%s241 + $0x3b8] sm:$0xff]
      %v1470 = vld [vmem:[%s241 + $0x3c0] sm:$0xff]
      %v1471 = vld [vmem:[%s241 + $0x3c8] sm:$0xff]
      %v1472 = vld [vmem:[%s241 + $0x3d0] sm:$0xff]
      %v1473 = vld [vmem:[%s241 + $0x3d8] sm:$0xff]
      %v1474 = vld [vmem:[%s241 + $0x3e0] sm:$0xff]
      %v1475 = vld [vmem:[%s241 + $0x3e8] sm:$0xff]
      %v1476 = vld [vmem:[%s241 + $0x3f0] sm:$0xff]
      %v1477 = vld [vmem:[%s241 + $0x3f8] sm:$0xff]
      %v1478 = vld [vmem:[%s241 + $0x400] sm:$0xff]
      %v1479 = vld [vmem:[%s241 + $0x408] sm:$0xff]
      %v1480 = vld [vmem:[%s241 + $0x410] sm:$0xff]
      %v1481 = vld [vmem:[%s241 + $0x418] sm:$0xff]
      %v1482 = vld [vmem:[%s241 + $0x420] sm:$0xff]
      %v1483 = vld [vmem:[%s241 + $0x428] sm:$0xff]
      %v1484 = vld [vmem:[%s241 + $0x430] sm:$0xff]
      %v1485 = vld [vmem:[%s241 + $0x438] sm:$0xff]
      %v1486 = vld [vmem:[%s241 + $0x440] sm:$0xff]
      %v1487 = vld [vmem:[%s241 + $0x448] sm:$0xff]
      %v1488 = vld [vmem:[%s241 + $0x450] sm:$0xff]
      %v1489 = vld [vmem:[%s241 + $0x458] sm:$0xff]
      %v1490 = vld [vmem:[%s241 + $0x460] sm:$0xff]
      %v1491 = vld [vmem:[%s241 + $0x468] sm:$0xff]
      %v1492 = vld [vmem:[%s241 + $0x470] sm:$0xff]
      %v1493 = vld [vmem:[%s241 + $0x478] sm:$0xff]
      %v1494 = vld [vmem:[%s241 + $0x480] sm:$0xff]
      %v1495 = vld [vmem:[%s241 + $0x488] sm:$0xff]
      %v1496 = vld [vmem:[%s241 + $0x490] sm:$0xff]
      %v1497 = vld [vmem:[%s241 + $0x498] sm:$0xff]
      %v1498 = vld [vmem:[%s241 + $0x4a0] sm:$0xff]
      %v1499 = vld [vmem:[%s241 + $0x4a8] sm:$0xff]
      %v1500 = vld [vmem:[%s241 + $0x4b0] sm:$0xff]
      %v1501 = vld [vmem:[%s241 + $0x4b8] sm:$0xff]
      %v1502 = vld [vmem:[%s241 + $0x4c0] sm:$0xff]
      %v1503 = vld [vmem:[%s241 + $0x4c8] sm:$0xff]
      %v1504 = vld [vmem:[%s241 + $0x4d0] sm:$0xff]
      %v1505 = vld [vmem:[%s241 + $0x4d8] sm:$0xff]
      %v1506 = vld [vmem:[%s241 + $0x4e0] sm:$0xff]
      %v1507 = vld [vmem:[%s241 + $0x4e8] sm:$0xff]
      %v1508 = vld [vmem:[%s241 + $0x4f0] sm:$0xff]
      %v1509 = vld [vmem:[%s241 + $0x4f8] sm:$0xff]
      %v1510 = vld [vmem:[%s241 + $0x500] sm:$0xff]
      %v1511 = vld [vmem:[%s241 + $0x508] sm:$0xff]
      %v1512 = vld [vmem:[%s241 + $0x510] sm:$0xff]
      %v1513 = vld [vmem:[%s241 + $0x518] sm:$0xff]
      %v1514 = vld [vmem:[%s241 + $0x520] sm:$0xff]
      %v1515 = vld [vmem:[%s241 + $0x528] sm:$0xff]
      %v1516 = vld [vmem:[%s241 + $0x530] sm:$0xff]
      %v1517 = vld [vmem:[%s241 + $0x538] sm:$0xff]
      %1519 = vset.pattern.permute.xlu0 0
      %1520 = vperm.xlu0 %1519, %v1183
      %v1521 = vpop.permute.xlu0 %1520
      %1524 = vset.pattern.permute.xlu0 0
      %1525 = vperm.xlu0 %1524, %v1185
      %v1526 = vpop.permute.xlu0 %1525
      %1529 = vset.pattern.permute.xlu0 0
      %1530 = vperm.xlu0 %1529, %v1187
      %v1531 = vpop.permute.xlu0 %1530
      %1534 = vset.pattern.permute.xlu0 0
      %1535 = vperm.xlu0 %1534, %v1189
      %v1536 = vpop.permute.xlu0 %1535
      %1539 = vset.pattern.permute.xlu0 0
      %1540 = vperm.xlu0 %1539, %v1191
      %v1541 = vpop.permute.xlu0 %1540
      %1544 = vset.pattern.permute.xlu0 0
      %1545 = vperm.xlu0 %1544, %v1193
      %v1546 = vpop.permute.xlu0 %1545
      %1549 = vset.pattern.permute.xlu0 0
      %1550 = vperm.xlu0 %1549, %v1195
      %v1551 = vpop.permute.xlu0 %1550
      %1554 = vset.pattern.permute.xlu0 0
      %1555 = vperm.xlu0 %1554, %v1197
      %v1556 = vpop.permute.xlu0 %1555
      %1559 = vset.pattern.permute.xlu0 0
      %1560 = vperm.xlu0 %1559, %v1199
      %v1561 = vpop.permute.xlu0 %1560
      %1564 = vset.pattern.permute.xlu0 0
      %1565 = vperm.xlu0 %1564, %v1201
      %v1566 = vpop.permute.xlu0 %1565
      %1569 = vset.pattern.permute.xlu0 0
      %1570 = vperm.xlu0 %1569, %v1203
      %v1571 = vpop.permute.xlu0 %1570
      %1574 = vset.pattern.permute.xlu0 0
      %1575 = vperm.xlu0 %1574, %v1205
      %v1576 = vpop.permute.xlu0 %1575
      %1579 = vset.pattern.permute.xlu0 0
      %1580 = vperm.xlu0 %1579, %v1207
      %v1581 = vpop.permute.xlu0 %1580
      %1584 = vset.pattern.permute.xlu0 0
      %1585 = vperm.xlu0 %1584, %v1209
      %v1586 = vpop.permute.xlu0 %1585
      %1589 = vset.pattern.permute.xlu0 0
      %1590 = vperm.xlu0 %1589, %v1211
      %v1591 = vpop.permute.xlu0 %1590
      %1594 = vset.pattern.permute.xlu0 0
      %1595 = vperm.xlu0 %1594, %v1213
      %v1596 = vpop.permute.xlu0 %1595
      %1599 = vset.pattern.permute.xlu0 0
      %1600 = vperm.xlu0 %1599, %v1215
      %v1601 = vpop.permute.xlu0 %1600
      %1604 = vset.pattern.permute.xlu0 0
      %1605 = vperm.xlu0 %1604, %v1217
      %v1606 = vpop.permute.xlu0 %1605
      %1609 = vset.pattern.permute.xlu0 0
      %1610 = vperm.xlu0 %1609, %v1219
      %v1611 = vpop.permute.xlu0 %1610
      %1614 = vset.pattern.permute.xlu0 0
      %1615 = vperm.xlu0 %1614, %v1221
      %v1616 = vpop.permute.xlu0 %1615
      %1619 = vset.pattern.permute.xlu0 0
      %1620 = vperm.xlu0 %1619, %v1223
      %v1621 = vpop.permute.xlu0 %1620
      %1624 = vset.pattern.permute.xlu0 0
      %1625 = vperm.xlu0 %1624, %v1225
      %v1626 = vpop.permute.xlu0 %1625
      %1629 = vset.pattern.permute.xlu0 0
      %1630 = vperm.xlu0 %1629, %v1227
      %v1631 = vpop.permute.xlu0 %1630
      %1634 = vset.pattern.permute.xlu0 0
      %1635 = vperm.xlu0 %1634, %v1229
      %v1636 = vpop.permute.xlu0 %1635
      %1639 = vset.pattern.permute.xlu0 0
      %1640 = vperm.xlu0 %1639, %v1231
      %v1641 = vpop.permute.xlu0 %1640
      %1644 = vset.pattern.permute.xlu0 0
      %1645 = vperm.xlu0 %1644, %v1233
      %v1646 = vpop.permute.xlu0 %1645
      %1649 = vset.pattern.permute.xlu0 0
      %1650 = vperm.xlu0 %1649, %v1235
      %v1651 = vpop.permute.xlu0 %1650
      %1654 = vset.pattern.permute.xlu0 0
      %1655 = vperm.xlu0 %1654, %v1237
      %v1656 = vpop.permute.xlu0 %1655
      %1659 = vset.pattern.permute.xlu0 0
      %1660 = vperm.xlu0 %1659, %v1239
      %v1661 = vpop.permute.xlu0 %1660
      %1664 = vset.pattern.permute.xlu0 0
      %1665 = vperm.xlu0 %1664, %v1241
      %v1666 = vpop.permute.xlu0 %1665
      %1669 = vset.pattern.permute.xlu0 0
      %1670 = vperm.xlu0 %1669, %v1243
      %v1671 = vpop.permute.xlu0 %1670
      %1674 = vset.pattern.permute.xlu0 0
      %1675 = vperm.xlu0 %1674, %v1245
      %v1676 = vpop.permute.xlu0 %1675
      %1679 = vset.pattern.permute.xlu0 0
      %1680 = vperm.xlu0 %1679, %v1247
      %v1681 = vpop.permute.xlu0 %1680
      %1684 = vset.pattern.permute.xlu0 0
      %1685 = vperm.xlu0 %1684, %v1249
      %v1686 = vpop.permute.xlu0 %1685
      %1689 = vset.pattern.permute.xlu0 0
      %1690 = vperm.xlu0 %1689, %v1251
      %v1691 = vpop.permute.xlu0 %1690
      %1694 = vset.pattern.permute.xlu0 0
      %1695 = vperm.xlu0 %1694, %v1253
      %v1696 = vpop.permute.xlu0 %1695
      %1699 = vset.pattern.permute.xlu0 0
      %1700 = vperm.xlu0 %1699, %v1255
      %v1701 = vpop.permute.xlu0 %1700
      %1704 = vset.pattern.permute.xlu0 0
      %1705 = vperm.xlu0 %1704, %v1257
      %v1706 = vpop.permute.xlu0 %1705
      %1709 = vset.pattern.permute.xlu0 0
      %1710 = vperm.xlu0 %1709, %v1259
      %v1711 = vpop.permute.xlu0 %1710
      %1714 = vset.pattern.permute.xlu0 0
      %1715 = vperm.xlu0 %1714, %v1261
      %v1716 = vpop.permute.xlu0 %1715
      %1719 = vset.pattern.permute.xlu0 0
      %1720 = vperm.xlu0 %1719, %v1263
      %v1721 = vpop.permute.xlu0 %1720
      %1724 = vset.pattern.permute.xlu0 0
      %1725 = vperm.xlu0 %1724, %v1265
      %v1726 = vpop.permute.xlu0 %1725
      %1729 = vset.pattern.permute.xlu0 0
      %1730 = vperm.xlu0 %1729, %v1267
      %v1731 = vpop.permute.xlu0 %1730
      %1734 = vset.pattern.permute.xlu0 0
      %1735 = vperm.xlu0 %1734, %v1269
      %v1736 = vpop.permute.xlu0 %1735
      %1739 = vset.pattern.permute.xlu0 0
      %1740 = vperm.xlu0 %1739, %v1271
      %v1741 = vpop.permute.xlu0 %1740
      %1744 = vset.pattern.permute.xlu0 0
      %1745 = vperm.xlu0 %1744, %v1273
      %v1746 = vpop.permute.xlu0 %1745
      %1749 = vset.pattern.permute.xlu0 0
      %1750 = vperm.xlu0 %1749, %v1275
      %v1751 = vpop.permute.xlu0 %1750
      %1754 = vset.pattern.permute.xlu0 0
      %1755 = vperm.xlu0 %1754, %v1277
      %v1756 = vpop.permute.xlu0 %1755
      %1759 = vset.pattern.permute.xlu0 0
      %1760 = vperm.xlu0 %1759, %v1279
      %v1761 = vpop.permute.xlu0 %1760
      %1764 = vset.pattern.permute.xlu0 0
      %1765 = vperm.xlu0 %1764, %v1281
      %v1766 = vpop.permute.xlu0 %1765
      %1769 = vset.pattern.permute.xlu0 0
      %1770 = vperm.xlu0 %1769, %v1283
      %v1771 = vpop.permute.xlu0 %1770
      %1774 = vset.pattern.permute.xlu0 0
      %1775 = vperm.xlu0 %1774, %v1285
      %v1776 = vpop.permute.xlu0 %1775
      %1779 = vset.pattern.permute.xlu0 0
      %1780 = vperm.xlu0 %1779, %v1287
      %v1781 = vpop.permute.xlu0 %1780
      %1784 = vset.pattern.permute.xlu0 0
      %1785 = vperm.xlu0 %1784, %v1289
      %v1786 = vpop.permute.xlu0 %1785
      %1789 = vset.pattern.permute.xlu0 0
      %1790 = vperm.xlu0 %1789, %v1291
      %v1791 = vpop.permute.xlu0 %1790
      %1794 = vset.pattern.permute.xlu0 0
      %1795 = vperm.xlu0 %1794, %v1293
      %v1796 = vpop.permute.xlu0 %1795
      %1799 = vset.pattern.permute.xlu0 0
      %1800 = vperm.xlu0 %1799, %v1295
      %v1801 = vpop.permute.xlu0 %1800
      %1804 = vset.pattern.permute.xlu0 0
      %1805 = vperm.xlu0 %1804, %v1297
      %v1806 = vpop.permute.xlu0 %1805
      %1809 = vset.pattern.permute.xlu0 0
      %1810 = vperm.xlu0 %1809, %v1299
      %v1811 = vpop.permute.xlu0 %1810
      %1814 = vset.pattern.permute.xlu0 0
      %1815 = vperm.xlu0 %1814, %v1301
      %v1816 = vpop.permute.xlu0 %1815
      %1819 = vset.pattern.permute.xlu0 0
      %1820 = vperm.xlu0 %1819, %v1303
      %v1821 = vpop.permute.xlu0 %1820
      %1824 = vset.pattern.permute.xlu0 0
      %1825 = vperm.xlu0 %1824, %v1305
      %v1826 = vpop.permute.xlu0 %1825
      %1829 = vset.pattern.permute.xlu0 0
      %1830 = vperm.xlu0 %1829, %v1307
      %v1831 = vpop.permute.xlu0 %1830
      %1834 = vset.pattern.permute.xlu0 0
      %1835 = vperm.xlu0 %1834, %v1309
      %v1836 = vpop.permute.xlu0 %1835
      %1839 = vset.pattern.permute.xlu0 0
      %1840 = vperm.xlu0 %1839, %v1311
      %v1841 = vpop.permute.xlu0 %1840
      %1844 = vset.pattern.permute.xlu0 0
      %1845 = vperm.xlu0 %1844, %v1313
      %v1846 = vpop.permute.xlu0 %1845
      %1849 = vset.pattern.permute.xlu0 0
      %1850 = vperm.xlu0 %1849, %v1315
      %v1851 = vpop.permute.xlu0 %1850
      %1854 = vset.pattern.permute.xlu0 0
      %1855 = vperm.xlu0 %1854, %v1317
      %v1856 = vpop.permute.xlu0 %1855
      %1859 = vset.pattern.permute.xlu0 0
      %1860 = vperm.xlu0 %1859, %v1319
      %v1861 = vpop.permute.xlu0 %1860
      %1864 = vset.pattern.permute.xlu0 0
      %1865 = vperm.xlu0 %1864, %v1321
      %v1866 = vpop.permute.xlu0 %1865
      %1869 = vset.pattern.permute.xlu0 0
      %1870 = vperm.xlu0 %1869, %v1323
      %v1871 = vpop.permute.xlu0 %1870
      %1874 = vset.pattern.permute.xlu0 0
      %1875 = vperm.xlu0 %1874, %v1325
      %v1876 = vpop.permute.xlu0 %1875
      %1879 = vset.pattern.permute.xlu0 0
      %1880 = vperm.xlu0 %1879, %v1327
      %v1881 = vpop.permute.xlu0 %1880
      %1884 = vset.pattern.permute.xlu0 0
      %1885 = vperm.xlu0 %1884, %v1329
      %v1886 = vpop.permute.xlu0 %1885
      %1889 = vset.pattern.permute.xlu0 0
      %1890 = vperm.xlu0 %1889, %v1331
      %v1891 = vpop.permute.xlu0 %1890
      %1894 = vset.pattern.permute.xlu0 0
      %1895 = vperm.xlu0 %1894, %v1333
      %v1896 = vpop.permute.xlu0 %1895
      %1899 = vset.pattern.permute.xlu0 0
      %1900 = vperm.xlu0 %1899, %v1335
      %v1901 = vpop.permute.xlu0 %1900
      %1904 = vset.pattern.permute.xlu0 0
      %1905 = vperm.xlu0 %1904, %v1337
      %v1906 = vpop.permute.xlu0 %1905
      %1909 = vset.pattern.permute.xlu0 0
      %1910 = vperm.xlu0 %1909, %v1339
      %v1911 = vpop.permute.xlu0 %1910
      %1914 = vset.pattern.permute.xlu0 0
      %1915 = vperm.xlu0 %1914, %v1341
      %v1916 = vpop.permute.xlu0 %1915
      %1919 = vset.pattern.permute.xlu0 0
      %1920 = vperm.xlu0 %1919, %v1343
      %v1921 = vpop.permute.xlu0 %1920
      %1924 = vset.pattern.permute.xlu0 0
      %1925 = vperm.xlu0 %1924, %v1345
      %v1926 = vpop.permute.xlu0 %1925
      %1929 = vset.pattern.permute.xlu0 0
      %1930 = vperm.xlu0 %1929, %v1347
      %v1931 = vpop.permute.xlu0 %1930
      %1934 = vset.pattern.permute.xlu0 0
      %1935 = vperm.xlu0 %1934, %v1349
      %v1936 = vpop.permute.xlu0 %1935
      %v1938 = vmul.f32 %v1350, %v1521
      %v1939 = vmul.f32 %v1351, %v1521
      %v1940 = vmul.f32 %v1352, %v1526
      %v1941 = vmul.f32 %v1353, %v1526
      %v1942 = vmul.f32 %v1354, %v1531
      %v1943 = vmul.f32 %v1355, %v1531
      %v1944 = vmul.f32 %v1356, %v1536
      %v1945 = vmul.f32 %v1357, %v1536
      %v1946 = vmul.f32 %v1358, %v1541
      %v1947 = vmul.f32 %v1359, %v1541
      %v1948 = vmul.f32 %v1360, %v1546
      %v1949 = vmul.f32 %v1361, %v1546
      %v1950 = vmul.f32 %v1362, %v1551
      %v1951 = vmul.f32 %v1363, %v1551
      %v1952 = vmul.f32 %v1364, %v1556
      %v1953 = vmul.f32 %v1365, %v1556
      %v1954 = vmul.f32 %v1366, %v1561
      %v1955 = vmul.f32 %v1367, %v1561
      %v1956 = vmul.f32 %v1368, %v1566
      %v1957 = vmul.f32 %v1369, %v1566
      %v1958 = vmul.f32 %v1370, %v1571
      %v1959 = vmul.f32 %v1371, %v1571
      %v1960 = vmul.f32 %v1372, %v1576
      %v1961 = vmul.f32 %v1373, %v1576
      %v1962 = vmul.f32 %v1374, %v1581
      %v1963 = vmul.f32 %v1375, %v1581
      %v1964 = vmul.f32 %v1376, %v1586
      %v1965 = vmul.f32 %v1377, %v1586
      %v1966 = vmul.f32 %v1378, %v1591
      %v1967 = vmul.f32 %v1379, %v1591
      %v1968 = vmul.f32 %v1380, %v1596
      %v1969 = vmul.f32 %v1381, %v1596
      %v1970 = vmul.f32 %v1382, %v1601
      %v1971 = vmul.f32 %v1383, %v1601
      %v1972 = vmul.f32 %v1384, %v1606
      %v1973 = vmul.f32 %v1385, %v1606
      %v1974 = vmul.f32 %v1386, %v1611
      %v1975 = vmul.f32 %v1387, %v1611
      %v1976 = vmul.f32 %v1388, %v1616
      %v1977 = vmul.f32 %v1389, %v1616
      %v1978 = vmul.f32 %v1390, %v1621
      %v1979 = vmul.f32 %v1391, %v1621
      %v1980 = vmul.f32 %v1392, %v1626
      %v1981 = vmul.f32 %v1393, %v1626
      %v1982 = vmul.f32 %v1394, %v1631
      %v1983 = vmul.f32 %v1395, %v1631
      %v1984 = vmul.f32 %v1396, %v1636
      %v1985 = vmul.f32 %v1397, %v1636
      %v1986 = vmul.f32 %v1398, %v1641
      %v1987 = vmul.f32 %v1399, %v1641
      %v1988 = vmul.f32 %v1400, %v1646
      %v1989 = vmul.f32 %v1401, %v1646
      %v1990 = vmul.f32 %v1402, %v1651
      %v1991 = vmul.f32 %v1403, %v1651
      %v1992 = vmul.f32 %v1404, %v1656
      %v1993 = vmul.f32 %v1405, %v1656
      %v1994 = vmul.f32 %v1406, %v1661
      %v1995 = vmul.f32 %v1407, %v1661
      %v1996 = vmul.f32 %v1408, %v1666
      %v1997 = vmul.f32 %v1409, %v1666
      %v1998 = vmul.f32 %v1410, %v1671
      %v1999 = vmul.f32 %v1411, %v1671
      %v2000 = vmul.f32 %v1412, %v1676
      %v2001 = vmul.f32 %v1413, %v1676
      %v2002 = vmul.f32 %v1414, %v1681
      %v2003 = vmul.f32 %v1415, %v1681
      %v2004 = vmul.f32 %v1416, %v1686
      %v2005 = vmul.f32 %v1417, %v1686
      %v2006 = vmul.f32 %v1418, %v1691
      %v2007 = vmul.f32 %v1419, %v1691
      %v2008 = vmul.f32 %v1420, %v1696
      %v2009 = vmul.f32 %v1421, %v1696
      %v2010 = vmul.f32 %v1422, %v1701
      %v2011 = vmul.f32 %v1423, %v1701
      %v2012 = vmul.f32 %v1424, %v1706
      %v2013 = vmul.f32 %v1425, %v1706
      %v2014 = vmul.f32 %v1426, %v1711
      %v2015 = vmul.f32 %v1427, %v1711
      %v2016 = vmul.f32 %v1428, %v1716
      %v2017 = vmul.f32 %v1429, %v1716
      %v2018 = vmul.f32 %v1430, %v1721
      %v2019 = vmul.f32 %v1431, %v1721
      %v2020 = vmul.f32 %v1432, %v1726
      %v2021 = vmul.f32 %v1433, %v1726
      %v2022 = vmul.f32 %v1434, %v1731
      %v2023 = vmul.f32 %v1435, %v1731
      %v2024 = vmul.f32 %v1436, %v1736
      %v2025 = vmul.f32 %v1437, %v1736
      %v2026 = vmul.f32 %v1438, %v1741
      %v2027 = vmul.f32 %v1439, %v1741
      %v2028 = vmul.f32 %v1440, %v1746
      %v2029 = vmul.f32 %v1441, %v1746
      %v2030 = vmul.f32 %v1442, %v1751
      %v2031 = vmul.f32 %v1443, %v1751
      %v2032 = vmul.f32 %v1444, %v1756
      %v2033 = vmul.f32 %v1445, %v1756
      %v2034 = vmul.f32 %v1446, %v1761
      %v2035 = vmul.f32 %v1447, %v1761
      %v2036 = vmul.f32 %v1448, %v1766
      %v2037 = vmul.f32 %v1449, %v1766
      %v2038 = vmul.f32 %v1450, %v1771
      %v2039 = vmul.f32 %v1451, %v1771
      %v2040 = vmul.f32 %v1452, %v1776
      %v2041 = vmul.f32 %v1453, %v1776
      %v2042 = vmul.f32 %v1454, %v1781
      %v2043 = vmul.f32 %v1455, %v1781
      %v2044 = vmul.f32 %v1456, %v1786
      %v2045 = vmul.f32 %v1457, %v1786
      %v2046 = vmul.f32 %v1458, %v1791
      %v2047 = vmul.f32 %v1459, %v1791
      %v2048 = vmul.f32 %v1460, %v1796
      %v2049 = vmul.f32 %v1461, %v1796
      %v2050 = vmul.f32 %v1462, %v1801
      %v2051 = vmul.f32 %v1463, %v1801
      %v2052 = vmul.f32 %v1464, %v1806
      %v2053 = vmul.f32 %v1465, %v1806
      %v2054 = vmul.f32 %v1466, %v1811
      %v2055 = vmul.f32 %v1467, %v1811
      %v2056 = vmul.f32 %v1468, %v1816
      %v2057 = vmul.f32 %v1469, %v1816
      %v2058 = vmul.f32 %v1470, %v1821
      %v2059 = vmul.f32 %v1471, %v1821
      %v2060 = vmul.f32 %v1472, %v1826
      %v2061 = vmul.f32 %v1473, %v1826
      %v2062 = vmul.f32 %v1474, %v1831
      %v2063 = vmul.f32 %v1475, %v1831
      %v2064 = vmul.f32 %v1476, %v1836
      %v2065 = vmul.f32 %v1477, %v1836
      %v2066 = vmul.f32 %v1478, %v1841
      %v2067 = vmul.f32 %v1479, %v1841
      %v2068 = vmul.f32 %v1480, %v1846
      %v2069 = vmul.f32 %v1481, %v1846
      %v2070 = vmul.f32 %v1482, %v1851
      %v2071 = vmul.f32 %v1483, %v1851
      %v2072 = vmul.f32 %v1484, %v1856
      %v2073 = vmul.f32 %v1485, %v1856
      %v2074 = vmul.f32 %v1486, %v1861
      %v2075 = vmul.f32 %v1487, %v1861
      %v2076 = vmul.f32 %v1488, %v1866
      %v2077 = vmul.f32 %v1489, %v1866
      %v2078 = vmul.f32 %v1490, %v1871
      %v2079 = vmul.f32 %v1491, %v1871
      %v2080 = vmul.f32 %v1492, %v1876
      %v2081 = vmul.f32 %v1493, %v1876
      %v2082 = vmul.f32 %v1494, %v1881
      %v2083 = vmul.f32 %v1495, %v1881
      %v2084 = vmul.f32 %v1496, %v1886
      %v2085 = vmul.f32 %v1497, %v1886
      %v2086 = vmul.f32 %v1498, %v1891
      %v2087 = vmul.f32 %v1499, %v1891
      %v2088 = vmul.f32 %v1500, %v1896
      %v2089 = vmul.f32 %v1501, %v1896
      %v2090 = vmul.f32 %v1502, %v1901
      %v2091 = vmul.f32 %v1503, %v1901
      %v2092 = vmul.f32 %v1504, %v1906
      %v2093 = vmul.f32 %v1505, %v1906
      %v2094 = vmul.f32 %v1506, %v1911
      %v2095 = vmul.f32 %v1507, %v1911
      %v2096 = vmul.f32 %v1508, %v1916
      %v2097 = vmul.f32 %v1509, %v1916
      %v2098 = vmul.f32 %v1510, %v1921
      %v2099 = vmul.f32 %v1511, %v1921
      %v2100 = vmul.f32 %v1512, %v1926
      %v2101 = vmul.f32 %v1513, %v1926
      %v2102 = vmul.f32 %v1514, %v1931
      %v2103 = vmul.f32 %v1515, %v1931
      %v2104 = vmul.f32 %v1516, %v1936
      %v2105 = vmul.f32 %v1517, %v1936
      %2106 = vst [vmem:[%s248] sm:$0xff] %v1938
      %vm2107 = vcmask 556032
      %2108 = vst.msk [vmem:[%s248 + $0x8] sm:$0xff] %vm2107, %v1939
      %2109 = vst [vmem:[%s248 + $0x10] sm:$0xff] %v1940
      %2110 = vst.msk [vmem:[%s248 + $0x18] sm:$0xff] %vm2107, %v1941
      %2111 = vst [vmem:[%s248 + $0x20] sm:$0xff] %v1942
      %2112 = vst.msk [vmem:[%s248 + $0x28] sm:$0xff] %vm2107, %v1943
      %2113 = vst [vmem:[%s248 + $0x30] sm:$0xff] %v1944
      %2114 = vst.msk [vmem:[%s248 + $0x38] sm:$0xff] %vm2107, %v1945
      %2115 = vst [vmem:[%s248 + $0x40] sm:$0xff] %v1946
      %2116 = vst.msk [vmem:[%s248 + $0x48] sm:$0xff] %vm2107, %v1947
      %2117 = vst [vmem:[%s248 + $0x50] sm:$0xff] %v1948
      %2118 = vst.msk [vmem:[%s248 + $0x58] sm:$0xff] %vm2107, %v1949
      %2119 = vst [vmem:[%s248 + $0x60] sm:$0xff] %v1950
      %2120 = vst.msk [vmem:[%s248 + $0x68] sm:$0xff] %vm2107, %v1951
      %2121 = vst [vmem:[%s248 + $0x70] sm:$0xff] %v1952
      %2122 = vst.msk [vmem:[%s248 + $0x78] sm:$0xff] %vm2107, %v1953
      %2123 = vst [vmem:[%s248 + $0x80] sm:$0xff] %v1954
      %2124 = vst.msk [vmem:[%s248 + $0x88] sm:$0xff] %vm2107, %v1955
      %2125 = vst [vmem:[%s248 + $0x90] sm:$0xff] %v1956
      %2126 = vst.msk [vmem:[%s248 + $0x98] sm:$0xff] %vm2107, %v1957
      %2127 = vst [vmem:[%s248 + $0xa0] sm:$0xff] %v1958
      %2128 = vst.msk [vmem:[%s248 + $0xa8] sm:$0xff] %vm2107, %v1959
      %2129 = vst [vmem:[%s248 + $0xb0] sm:$0xff] %v1960
      %2130 = vst.msk [vmem:[%s248 + $0xb8] sm:$0xff] %vm2107, %v1961
      %2131 = vst [vmem:[%s248 + $0xc0] sm:$0xff] %v1962
      %2132 = vst.msk [vmem:[%s248 + $0xc8] sm:$0xff] %vm2107, %v1963
      %2133 = vst [vmem:[%s248 + $0xd0] sm:$0xff] %v1964
      %2134 = vst.msk [vmem:[%s248 + $0xd8] sm:$0xff] %vm2107, %v1965
      %2135 = vst [vmem:[%s248 + $0xe0] sm:$0xff] %v1966
      %2136 = vst.msk [vmem:[%s248 + $0xe8] sm:$0xff] %vm2107, %v1967
      %2137 = vst [vmem:[%s248 + $0xf0] sm:$0xff] %v1968
      %2138 = vst.msk [vmem:[%s248 + $0xf8] sm:$0xff] %vm2107, %v1969
      %2139 = vst [vmem:[%s248 + $0x100] sm:$0xff] %v1970
      %2140 = vst.msk [vmem:[%s248 + $0x108] sm:$0xff] %vm2107, %v1971
      %2141 = vst [vmem:[%s248 + $0x110] sm:$0xff] %v1972
      %2142 = vst.msk [vmem:[%s248 + $0x118] sm:$0xff] %vm2107, %v1973
      %2143 = vst [vmem:[%s248 + $0x120] sm:$0xff] %v1974
      %2144 = vst.msk [vmem:[%s248 + $0x128] sm:$0xff] %vm2107, %v1975
      %2145 = vst [vmem:[%s248 + $0x130] sm:$0xff] %v1976
      %2146 = vst.msk [vmem:[%s248 + $0x138] sm:$0xff] %vm2107, %v1977
      %2147 = vst [vmem:[%s248 + $0x140] sm:$0xff] %v1978
      %2148 = vst.msk [vmem:[%s248 + $0x148] sm:$0xff] %vm2107, %v1979
      %2149 = vst [vmem:[%s248 + $0x150] sm:$0xff] %v1980
      %2150 = vst.msk [vmem:[%s248 + $0x158] sm:$0xff] %vm2107, %v1981
      %2151 = vst [vmem:[%s248 + $0x160] sm:$0xff] %v1982
      %2152 = vst.msk [vmem:[%s248 + $0x168] sm:$0xff] %vm2107, %v1983
      %2153 = vst [vmem:[%s248 + $0x170] sm:$0xff] %v1984
      %2154 = vst.msk [vmem:[%s248 + $0x178] sm:$0xff] %vm2107, %v1985
      %2155 = vst [vmem:[%s248 + $0x180] sm:$0xff] %v1986
      %2156 = vst.msk [vmem:[%s248 + $0x188] sm:$0xff] %vm2107, %v1987
      %2157 = vst [vmem:[%s248 + $0x190] sm:$0xff] %v1988
      %2158 = vst.msk [vmem:[%s248 + $0x198] sm:$0xff] %vm2107, %v1989
      %2159 = vst [vmem:[%s248 + $0x1a0] sm:$0xff] %v1990
      %2160 = vst.msk [vmem:[%s248 + $0x1a8] sm:$0xff] %vm2107, %v1991
      %2161 = vst [vmem:[%s248 + $0x1b0] sm:$0xff] %v1992
      %2162 = vst.msk [vmem:[%s248 + $0x1b8] sm:$0xff] %vm2107, %v1993
      %2163 = vst [vmem:[%s248 + $0x1c0] sm:$0xff] %v1994
      %2164 = vst.msk [vmem:[%s248 + $0x1c8] sm:$0xff] %vm2107, %v1995
      %2165 = vst [vmem:[%s248 + $0x1d0] sm:$0xff] %v1996
      %2166 = vst.msk [vmem:[%s248 + $0x1d8] sm:$0xff] %vm2107, %v1997
      %2167 = vst [vmem:[%s248 + $0x1e0] sm:$0xff] %v1998
      %2168 = vst.msk [vmem:[%s248 + $0x1e8] sm:$0xff] %vm2107, %v1999
      %2169 = vst [vmem:[%s248 + $0x1f0] sm:$0xff] %v2000
      %2170 = vst.msk [vmem:[%s248 + $0x1f8] sm:$0xff] %vm2107, %v2001
      %2171 = vst [vmem:[%s248 + $0x200] sm:$0xff] %v2002
      %2172 = vst.msk [vmem:[%s248 + $0x208] sm:$0xff] %vm2107, %v2003
      %2173 = vst [vmem:[%s248 + $0x210] sm:$0xff] %v2004
      %2174 = vst.msk [vmem:[%s248 + $0x218] sm:$0xff] %vm2107, %v2005
      %2175 = vst [vmem:[%s248 + $0x220] sm:$0xff] %v2006
      %2176 = vst.msk [vmem:[%s248 + $0x228] sm:$0xff] %vm2107, %v2007
      %2177 = vst [vmem:[%s248 + $0x230] sm:$0xff] %v2008
      %2178 = vst.msk [vmem:[%s248 + $0x238] sm:$0xff] %vm2107, %v2009
      %2179 = vst [vmem:[%s248 + $0x240] sm:$0xff] %v2010
      %2180 = vst.msk [vmem:[%s248 + $0x248] sm:$0xff] %vm2107, %v2011
      %2181 = vst [vmem:[%s248 + $0x250] sm:$0xff] %v2012
      %2182 = vst.msk [vmem:[%s248 + $0x258] sm:$0xff] %vm2107, %v2013
      %2183 = vst [vmem:[%s248 + $0x260] sm:$0xff] %v2014
      %2184 = vst.msk [vmem:[%s248 + $0x268] sm:$0xff] %vm2107, %v2015
      %2185 = vst [vmem:[%s248 + $0x270] sm:$0xff] %v2016
      %2186 = vst.msk [vmem:[%s248 + $0x278] sm:$0xff] %vm2107, %v2017
      %2187 = vst [vmem:[%s248 + $0x280] sm:$0xff] %v2018
      %2188 = vst.msk [vmem:[%s248 + $0x288] sm:$0xff] %vm2107, %v2019
      %2189 = vst [vmem:[%s248 + $0x290] sm:$0xff] %v2020
      %2190 = vst.msk [vmem:[%s248 + $0x298] sm:$0xff] %vm2107, %v2021
      %2191 = vst [vmem:[%s248 + $0x2a0] sm:$0xff] %v2022
      %2192 = vst.msk [vmem:[%s248 + $0x2a8] sm:$0xff] %vm2107, %v2023
      %2193 = vst [vmem:[%s248 + $0x2b0] sm:$0xff] %v2024
      %2194 = vst.msk [vmem:[%s248 + $0x2b8] sm:$0xff] %vm2107, %v2025
      %2195 = vst [vmem:[%s248 + $0x2c0] sm:$0xff] %v2026
      %2196 = vst.msk [vmem:[%s248 + $0x2c8] sm:$0xff] %vm2107, %v2027
      %2197 = vst [vmem:[%s248 + $0x2d0] sm:$0xff] %v2028
      %2198 = vst.msk [vmem:[%s248 + $0x2d8] sm:$0xff] %vm2107, %v2029
      %2199 = vst [vmem:[%s248 + $0x2e0] sm:$0xff] %v2030
      %2200 = vst.msk [vmem:[%s248 + $0x2e8] sm:$0xff] %vm2107, %v2031
      %2201 = vst [vmem:[%s248 + $0x2f0] sm:$0xff] %v2032
      %2202 = vst.msk [vmem:[%s248 + $0x2f8] sm:$0xff] %vm2107, %v2033
      %2203 = vst [vmem:[%s248 + $0x300] sm:$0xff] %v2034
      %2204 = vst.msk [vmem:[%s248 + $0x308] sm:$0xff] %vm2107, %v2035
      %2205 = vst [vmem:[%s248 + $0x310] sm:$0xff] %v2036
      %2206 = vst.msk [vmem:[%s248 + $0x318] sm:$0xff] %vm2107, %v2037
      %2207 = vst [vmem:[%s248 + $0x320] sm:$0xff] %v2038
      %2208 = vst.msk [vmem:[%s248 + $0x328] sm:$0xff] %vm2107, %v2039
      %2209 = vst [vmem:[%s248 + $0x330] sm:$0xff] %v2040
      %2210 = vst.msk [vmem:[%s248 + $0x338] sm:$0xff] %vm2107, %v2041
      %2211 = vst [vmem:[%s248 + $0x340] sm:$0xff] %v2042
      %2212 = vst.msk [vmem:[%s248 + $0x348] sm:$0xff] %vm2107, %v2043
      %2213 = vst [vmem:[%s248 + $0x350] sm:$0xff] %v2044
      %2214 = vst.msk [vmem:[%s248 + $0x358] sm:$0xff] %vm2107, %v2045
      %2215 = vst [vmem:[%s248 + $0x360] sm:$0xff] %v2046
      %2216 = vst.msk [vmem:[%s248 + $0x368] sm:$0xff] %vm2107, %v2047
      %2217 = vst [vmem:[%s248 + $0x370] sm:$0xff] %v2048
      %2218 = vst.msk [vmem:[%s248 + $0x378] sm:$0xff] %vm2107, %v2049
      %2219 = vst [vmem:[%s248 + $0x380] sm:$0xff] %v2050
      %2220 = vst.msk [vmem:[%s248 + $0x388] sm:$0xff] %vm2107, %v2051
      %2221 = vst [vmem:[%s248 + $0x390] sm:$0xff] %v2052
      %2222 = vst.msk [vmem:[%s248 + $0x398] sm:$0xff] %vm2107, %v2053
      %2223 = vst [vmem:[%s248 + $0x3a0] sm:$0xff] %v2054
      %2224 = vst.msk [vmem:[%s248 + $0x3a8] sm:$0xff] %vm2107, %v2055
      %2225 = vst [vmem:[%s248 + $0x3b0] sm:$0xff] %v2056
      %2226 = vst.msk [vmem:[%s248 + $0x3b8] sm:$0xff] %vm2107, %v2057
      %2227 = vst [vmem:[%s248 + $0x3c0] sm:$0xff] %v2058
      %2228 = vst.msk [vmem:[%s248 + $0x3c8] sm:$0xff] %vm2107, %v2059
      %2229 = vst [vmem:[%s248 + $0x3d0] sm:$0xff] %v2060
      %2230 = vst.msk [vmem:[%s248 + $0x3d8] sm:$0xff] %vm2107, %v2061
      %2231 = vst [vmem:[%s248 + $0x3e0] sm:$0xff] %v2062
      %2232 = vst.msk [vmem:[%s248 + $0x3e8] sm:$0xff] %vm2107, %v2063
      %2233 = vst [vmem:[%s248 + $0x3f0] sm:$0xff] %v2064
      %2234 = vst.msk [vmem:[%s248 + $0x3f8] sm:$0xff] %vm2107, %v2065
      %2235 = vst [vmem:[%s248 + $0x400] sm:$0xff] %v2066
      %2236 = vst.msk [vmem:[%s248 + $0x408] sm:$0xff] %vm2107, %v2067
      %2237 = vst [vmem:[%s248 + $0x410] sm:$0xff] %v2068
      %2238 = vst.msk [vmem:[%s248 + $0x418] sm:$0xff] %vm2107, %v2069
      %2239 = vst [vmem:[%s248 + $0x420] sm:$0xff] %v2070
      %2240 = vst.msk [vmem:[%s248 + $0x428] sm:$0xff] %vm2107, %v2071
      %2241 = vst [vmem:[%s248 + $0x430] sm:$0xff] %v2072
      %2242 = vst.msk [vmem:[%s248 + $0x438] sm:$0xff] %vm2107, %v2073
      %2243 = vst [vmem:[%s248 + $0x440] sm:$0xff] %v2074
      %2244 = vst.msk [vmem:[%s248 + $0x448] sm:$0xff] %vm2107, %v2075
      %2245 = vst [vmem:[%s248 + $0x450] sm:$0xff] %v2076
      %2246 = vst.msk [vmem:[%s248 + $0x458] sm:$0xff] %vm2107, %v2077
      %2247 = vst [vmem:[%s248 + $0x460] sm:$0xff] %v2078
      %2248 = vst.msk [vmem:[%s248 + $0x468] sm:$0xff] %vm2107, %v2079
      %2249 = vst [vmem:[%s248 + $0x470] sm:$0xff] %v2080
      %2250 = vst.msk [vmem:[%s248 + $0x478] sm:$0xff] %vm2107, %v2081
      %2251 = vst [vmem:[%s248 + $0x480] sm:$0xff] %v2082
      %2252 = vst.msk [vmem:[%s248 + $0x488] sm:$0xff] %vm2107, %v2083
      %2253 = vst [vmem:[%s248 + $0x490] sm:$0xff] %v2084
      %2254 = vst.msk [vmem:[%s248 + $0x498] sm:$0xff] %vm2107, %v2085
      %2255 = vst [vmem:[%s248 + $0x4a0] sm:$0xff] %v2086
      %2256 = vst.msk [vmem:[%s248 + $0x4a8] sm:$0xff] %vm2107, %v2087
      %2257 = vst [vmem:[%s248 + $0x4b0] sm:$0xff] %v2088
      %2258 = vst.msk [vmem:[%s248 + $0x4b8] sm:$0xff] %vm2107, %v2089
      %2259 = vst [vmem:[%s248 + $0x4c0] sm:$0xff] %v2090
      %2260 = vst.msk [vmem:[%s248 + $0x4c8] sm:$0xff] %vm2107, %v2091
      %2261 = vst [vmem:[%s248 + $0x4d0] sm:$0xff] %v2092
      %2262 = vst.msk [vmem:[%s248 + $0x4d8] sm:$0xff] %vm2107, %v2093
      %2263 = vst [vmem:[%s248 + $0x4e0] sm:$0xff] %v2094
      %2264 = vst.msk [vmem:[%s248 + $0x4e8] sm:$0xff] %vm2107, %v2095
      %2265 = vst [vmem:[%s248 + $0x4f0] sm:$0xff] %v2096
      %2266 = vst.msk [vmem:[%s248 + $0x4f8] sm:$0xff] %vm2107, %v2097
      %2267 = vst [vmem:[%s248 + $0x500] sm:$0xff] %v2098
      %2268 = vst.msk [vmem:[%s248 + $0x508] sm:$0xff] %vm2107, %v2099
      %2269 = vst [vmem:[%s248 + $0x510] sm:$0xff] %v2100
      %2270 = vst.msk [vmem:[%s248 + $0x518] sm:$0xff] %vm2107, %v2101
      %2271 = vst [vmem:[%s248 + $0x520] sm:$0xff] %v2102
      %2272 = vst.msk [vmem:[%s248 + $0x528] sm:$0xff] %vm2107, %v2103
      %2273 = vst [vmem:[%s248 + $0x530] sm:$0xff] %v2104
      %2274 = vst.msk [vmem:[%s248 + $0x538] sm:$0xff] %vm2107, %v2105
      %s2275 = smul.u32 84, %s15
      %p2276 = scmp.lt.s32.totalorder %s2275, 167
      %s2277 = scalar_select %p2276, %s2275, 167
      %s2278 = smul.addr %s2277, 2
      %s2279 = smul.addr %s2278, 8
      %s2280 = scalar_lea.vmem %s4, %s2279
      // Predicated region
      $region37: #{tpu_custom_call.1} parent=35 // pred_check
        %p2281 = pneg %p132
      $region38: #{tpu_custom_call.1} parent=35 // pred_check_branch
        %2283 = sbr.rel (%p2281) target = $region40
      $region39: #{tpu_custom_call.1} parent=35 // pred_region
        %s2284 = smul.u32 84, %s15
      $region40: #{tpu_custom_call.1} parent=35 // pred_fallthru
        _
    $region36: #{tpu_custom_call.1} parent=5 // pred_fallthru
      _
    %p2285 = scmp.le.s32.totalorder 2, %s10
    // Predicated region
    $region41: #{tpu_custom_call.1} parent=5 // pred_check
      %p2286 = pneg %p2285
    $region42: #{tpu_custom_call.1} parent=5 // pred_check_branch
      %2288 = sbr.rel (%p2286) target = $region44
    $region43: #{tpu_custom_call.1} parent=5 // pred_region
      %s2289 = ssub.s32 %s10, 2
      // Predicated region
      $region45: #{tpu_custom_call.1} parent=43 // pred_check
        %p2290 = pneg %p138
      $region46: #{tpu_custom_call.1} parent=43 // pred_check_branch
        %2292 = sbr.rel (%p2290) target = $region48
      $region47: #{tpu_custom_call.1} parent=43 // pred_region
        %s2293 = smul.u32 84, %s16
        %p2294 = scmp.lt.s32.totalorder %s2293, 167
        %s2295 = scalar_select %p2294, %s2293, 167
        %s2296 = smul.addr %s2295, 2
        %s2297 = smul.addr %s2296, 8
        %s2298 = scalar_lea.vmem %s4, %s2297
      $region48: #{tpu_custom_call.1} parent=43 // pred_fallthru
        _
    $region44: #{tpu_custom_call.1} parent=5 // pred_fallthru
      _
  $region6: #{tpu_custom_call.1} parent=0 // loop_footer
    %s14 = sadd.s32 1, %s10
  $region7: #{tpu_custom_call.1} parent=0 // loop_footer_branch
    %9 = sbr.rel target = $region3
  $region8: #{tpu_custom_call.1} parent=0 // loop_exit
    _

</llo_original>
